<compile_context>
chip_gen: v5e
topology: v5e:2x2
jax: 0.10.0
libtpu: 0.0.40
codegen_flags: <defaults>
</compile_context>

<pallas_src>
import functools

import jax
import jax.numpy as jnp
from jax import lax
from jax.experimental import pallas as pl
from jax.experimental.pallas import tpu as pltpu

_LANE = 128


# ---------------------------------------------------------------------------
# Helpers
# ---------------------------------------------------------------------------
def _round_up(v, m):
    return ((v + m - 1) // m) * m


def _sublane_quantum(dtype):
    # f32 -> 8, bf16 -> 16 sublanes per native vreg tile.
    return max(8, 32 // jnp.dtype(dtype).itemsize)


def _padded_2d_bytes(rows, cols, dtype):
    """Padding-aware VMEM footprint of the trailing (rows, cols) tile."""
    return (_round_up(max(int(rows), 1), _sublane_quantum(dtype))
            * _round_up(max(int(cols), 1), _LANE)
            * jnp.dtype(dtype).itemsize)


def _chip_budgets():
    """Per-generation block budget / scoped-VMEM limit."""
    vmem_cap = None
    try:
        vmem_cap = int(getattr(pltpu.get_tpu_info(), "vmem_capacity_bytes"))
    except Exception:
        vmem_cap = None
    if vmem_cap is not None and vmem_cap > 64 * 1024 * 1024:
        # v5e / v6e class (128 MiB physical VMEM): big double-buffered blocks
        # amortize the ~0.35us/step grid overhead on this HBM-bound op.
        return dict(x_block_budget=8 * 1024 * 1024,
                    vmem_limit=80 * 1024 * 1024)
    # v7x class (64 MiB physical) or unknown: stay conservative so
    # double-buffering always survives.
    return dict(x_block_budget=3 * 1024 * 1024,
                vmem_limit=32 * 1024 * 1024)


def _precise_reciprocal(s):
    # EUP approximate reciprocal + one Newton-Raphson step (~f32 precision).
    r = pl.reciprocal(s, approx=True)
    return r * (2.0 - s * r)


# ---------------------------------------------------------------------------
# dim='yz' (softmax/reduce over X): sublane-reduce kernel.
#   x_ref (1, tc, X, tl)  w_ref (1, 1, X, tl)  o_ref (1, tc, tl)
# ---------------------------------------------------------------------------
def _yz_kernel(x_ref, w_ref, o_ref, *, r_chunk):
    w = w_ref[0, 0].astype(jnp.float32)                       # (X, tl)
    e = jnp.exp(w - jnp.max(w, axis=0, keepdims=True))        # (X, tl)
    inv = _precise_reciprocal(jnp.sum(e, axis=0, keepdims=True))   # (1, tl)

    tc = x_ref.shape[1]
    big_r = x_ref.shape[2]
    tl = x_ref.shape[3]
    acc = jnp.zeros((tc, tl), jnp.float32)
    # Chunked f32 accumulation over the reduce axis (never materializes a
    # full-block f32 product).
    for r0 in range(0, big_r, r_chunk):
        r1 = min(big_r, r0 + r_chunk)
        xc = x_ref[0, :, r0:r1, :].astype(jnp.float32)         # (tc, rc, tl)
        acc = acc + jnp.sum(xc * e[r0:r1, :], axis=1)
    o_ref[0] = (acc * inv).astype(o_ref.dtype)


def _pool_yz(x, w, budgets):
    """x: (B, C, X, Y, Z), w: (B, 1, X, Y, Z) -> (B, C, Y, Z)."""
    B, C, X, Y, Z = x.shape
    L = Y * Z
    dtype = x.dtype
    isz = jnp.dtype(dtype).itemsize
    subl = _sublane_quantum(dtype)
    x4 = x.reshape(B, C, X, L)
    w4 = w.reshape(B, 1, X, L)

    budget = budgets["x_block_budget"]
    col_bytes = _round_up(X, subl) * isz       # padded bytes per lane column
    # Prefer the full lane extent (long contiguous HBM runs, unmasked stores);
    # only split L when even tc=8 channels would not fit the budget.
    tl_cap = max(_LANE, ((budget // (8 * col_bytes)) // _LANE) * _LANE)
    tl = L if (L <= tl_cap or L <= _LANE) else tl_cap
    row_bytes = col_bytes * _round_up(tl, _LANE)   # padded per-channel bytes
    tc = budget // row_bytes
    if tc >= C:
        tc = C
    else:
        tc = max(subl, (tc // subl) * subl)    # out-block sublane alignment
        tc = min(tc, C)

    # v7x megacore: make sure there are >=2 parallel grid steps when possible.
    if B * pl.cdiv(L, tl) * pl.cdiv(C, tc) < 2 and C >= 2 * subl:
        tc = _round_up(pl.cdiv(C, 2), subl)

    grid = (B, pl.cdiv(L, tl), pl.cdiv(C, tc))
    out = pl.pallas_call(
        functools.partial(_yz_kernel, r_chunk=subl),
        out_shape=jax.ShapeDtypeStruct((B, C, L), dtype),
        grid_spec=pltpu.PrefetchScalarGridSpec(
            num_scalar_prefetch=0,
            grid=grid,
            in_specs=[
                pl.BlockSpec((1, tc, X, tl), lambda b, l, c: (b, c, 0, l)),
                pl.BlockSpec((1, 1, X, tl), lambda b, l, c: (b, 0, 0, l)),
            ],
            out_specs=pl.BlockSpec((1, tc, tl), lambda b, l, c: (b, c, l)),
        ),
        compiler_params=pltpu.CompilerParams(
            dimension_semantics=("parallel", "parallel", "parallel"),
            vmem_limit_bytes=budgets["vmem_limit"],
        ),
    )(x4, w4)
    return out.reshape(B, C, Y, Z)


# ---------------------------------------------------------------------------
# dim='xy' / 'zx': segmented lane reduction via an MXU 0/1 segment matrix.
#   x_ref (1, tc, tx, L)  w_ref (1, 1, tx, L)  s_ref (L, n_out)
#   o_ref (1, tc, tx, n_out)        with L = Y*Z (lane-dense, native order)
# ---------------------------------------------------------------------------
def _seg_kernel(x_ref, w_ref, s_ref, o_ref, *, precision):
    w = w_ref[0, 0].astype(jnp.float32)                        # (tx, L)
    # Per-row max is constant within every segment of that row, so the
    # softmax stays exact; avoids a strided segmented max.
    e = jnp.exp(w - jnp.max(w, axis=-1, keepdims=True))        # (tx, L)
    s = s_ref[...]                                             # (L, n_out)
    denom = jnp.dot(e, s, precision=precision,
                    preferred_element_type=jnp.float32)        # (tx, n_out)
    inv = _precise_reciprocal(denom)

    tx = x_ref.shape[2]
    # Static per-x-row loop keeps f32 temps at (tc, L) instead of block size.
    for xi in range(tx):
        xc = x_ref[0, :, xi, :].astype(jnp.float32)            # (tc, L)
        prod = xc * e[xi:xi + 1, :]                            # (tc, L)
        red = jnp.dot(prod, s, precision=precision,
                      preferred_element_type=jnp.float32)      # (tc, n_out)
        o_ref[0, :, xi, :] = (red * inv[xi:xi + 1, :]).astype(o_ref.dtype)


def _pool_segmented(x, w, reduce_axis, budgets):
    """reduce_axis='z' -> dim='xy' (softmax over Z, keep (X, Y));
       reduce_axis='y' -> dim='zx' (softmax over Y, keep (X, Z))."""
    B, C, X, Y, Z = x.shape
    L = Y * Z
    dtype = x.dtype
    x4 = x.reshape(B, C, X, L)
    w4 = w.reshape(B, 1, X, L)

    j = jnp.arange(L)
    if reduce_axis == 'z':          # out index m = y  (flat lane j = y*Z + z)
        n_out = Y
        seg_id = j // Z
    else:                           # out index m = z
        n_out = Z
        seg_id = j % Z
    seg_mat = (seg_id[:, None] == jnp.arange(n_out)[None, :]).astype(jnp.float32)

    budget = budgets["x_block_budget"]

    def blk_row_bytes(txv):         # padded x-block bytes per channel
        return _padded_2d_bytes(txv, L, dtype)

    tx = min(X, 8)
    tc = int(min(C, max(1, budget // blk_row_bytes(tx))))
    # If C is exhausted and budget remains, widen tx (keeps 8-alignment).
    while tc == C and tx + 8 <= min(X, 32) and C * blk_row_bytes(tx + 8) <= budget:
        tx += 8
    tx = min(tx, X)

    # v7x megacore: keep >=2 parallel grid steps (tc has no alignment need).
    if B * pl.cdiv(X, tx) * pl.cdiv(C, tc) < 2 and C > 1:
        tc = pl.cdiv(C, 2)

    grid = (B, pl.cdiv(X, tx), pl.cdiv(C, tc))
    out = pl.pallas_call(
        functools.partial(_seg_kernel, precision=lax.Precision.HIGHEST),
        out_shape=jax.ShapeDtypeStruct((B, C, X, n_out), dtype),
        grid_spec=pltpu.PrefetchScalarGridSpec(
            num_scalar_prefetch=0,
            grid=grid,
            in_specs=[
                pl.BlockSpec((1, tc, tx, L), lambda b, xi, c: (b, c, xi, 0)),
                pl.BlockSpec((1, 1, tx, L), lambda b, xi, c: (b, 0, xi, 0)),
                pl.BlockSpec((L, n_out), lambda b, xi, c: (0, 0)),
            ],
            out_specs=pl.BlockSpec((1, tc, tx, n_out),
                                   lambda b, xi, c: (b, c, xi, 0)),
        ),
        compiler_params=pltpu.CompilerParams(
            dimension_semantics=("parallel", "parallel", "parallel"),
            vmem_limit_bytes=budgets["vmem_limit"],
        ),
    )(x4, w4, seg_mat)
    return out


# ---------------------------------------------------------------------------
# Public wrapper matching GlobalWeightedAvgPool3D.forward
# ---------------------------------------------------------------------------
def global_weighted_avg_pool_3d(x, weights, dim):
    """x: (B, C, X, Y, Z), weights: (B, 3, X, Y, Z), dim in {'xy','yz','zx'}."""
    budgets = _chip_budgets()
    if dim == 'xy':     # softmax/sum over Z -> (B, C, X, Y)
        return _pool_segmented(x, weights[:, 0:1], 'z', budgets)
    elif dim == 'yz':   # softmax/sum over X -> (B, C, Y, Z)
        return _pool_yz(x, weights[:, 1:2], budgets)
    elif dim == 'zx':   # softmax/sum over Y -> (B, C, X, Z)
        return _pool_segmented(x, weights[:, 2:3], 'y', budgets)
    raise ValueError(dim)


# ---------------------------------------------------------------------------
# Pure-JAX reference (mirrors the PyTorch module)
# ---------------------------------------------------------------------------
def _reference(x, weights, dim):
    if dim == 'xy':
        w = jax.nn.softmax(weights[:, 0:1], axis=-1)
        return (x * w).sum(axis=-1)
    if dim == 'yz':
        w = jax.nn.softmax(weights[:, 1:2], axis=-3)
        return (x * w).sum(axis=-3)
    w = jax.nn.softmax(weights[:, 2:3], axis=-2)
    return (x * w).sum(axis=-2)


if __name__ == "__main__":
    key = jax.random.PRNGKey(0)
    kx, kw = jax.random.split(key)

    B, C, X, Y, Z = 2, 4, 8, 8, 8
    x = jax.random.normal(kx, (B, C, X, Y, Z), dtype=jnp.float32)
    weights = jax.random.normal(kw, (B, 3, X, Y, Z), dtype=jnp.float32)

    ok = True
    for dim in ('xy', 'yz', 'zx'):
        out = jax.block_until_ready(global_weighted_avg_pool_3d(x, weights, dim))
        ref = _reference(x, weights, dim)
        if out.shape != ref.shape or not jnp.allclose(out, ref,
                                                      atol=1e-5, rtol=1e-5):
            ok = False
            print(f"MISMATCH dim={dim}: max|err|="
                  f"{float(jnp.max(jnp.abs(out - ref)))}")
    if ok:
        print("KERNEL_OK")
</pallas_src>

<mosaic_0001>
module attributes {stable_mosaic.version = 11 : i64} {
  func.func @_seg_kernel(%arg0: i32, %arg1: i32, %arg2: i32, %arg3: memref<1x4x8x64xf32, #tpu.memory_space<vmem>>, %arg4: memref<1x1x8x64xf32, #tpu.memory_space<vmem>>, %arg5: memref<64x8xf32, #tpu.memory_space<vmem>>, %arg6: memref<1x4x8x8xf32, #tpu.memory_space<vmem>>) attributes {dimension_semantics = [#tpu.dimension_semantics<parallel>, #tpu.dimension_semantics<parallel>, #tpu.dimension_semantics<parallel>], iteration_bounds = array<i64: 2, 1, 1>, scalar_prefetch = 0 : i64, scratch_operands = 0 : i64, tpu.core_type = #tpu.core_type<tc>, window_params = [{transform_indices = @transform_0, window_bounds = array<i64: 1, 4, 8, 64>}, {transform_indices = @transform_1, window_bounds = array<i64: 1, 1, 8, 64>}, {pipeline_mode = #tpu.pipeline_mode<synchronous>, transform_indices = @transform_2, window_bounds = array<i64: 64, 8>}, {transform_indices = @transform_3, window_bounds = array<i64: 1, 4, 8, 8>}]} {
    %c0 = arith.constant 0 : index
    %c0_0 = arith.constant 0 : index
    %c0_1 = arith.constant 0 : index
    %c0_2 = arith.constant 0 : index
    %0 = vector.load %arg4[%c0, %c0_0, %c0_1, %c0_2] : memref<1x1x8x64xf32, #tpu.memory_space<vmem>>, vector<1x1x8x64xf32>
    %1 = vector.shape_cast %0 : vector<1x1x8x64xf32> to vector<8x64xf32>
    %cst = arith.constant dense<0xFF800000> : vector<8xf32>
    %2 = vector.multi_reduction <maximumf>, %1, %cst [1] : vector<8x64xf32> to vector<8xf32>
    %3 = vector.shape_cast %2 : vector<8xf32> to vector<8x1xf32>
    %4 = vector.broadcast %3 : vector<8x1xf32> to vector<8x64xf32>
    %5 = arith.subf %1, %4 : vector<8x64xf32>
    %6 = math.exp %5 : vector<8x64xf32>
    %c0_3 = arith.constant 0 : index
    %c0_4 = arith.constant 0 : index
    %7 = vector.load %arg5[%c0_3, %c0_4] : memref<64x8xf32, #tpu.memory_space<vmem>>, vector<64x8xf32>
    %cst_5 = arith.constant dense<0.000000e+00> : vector<8x8xf32>
    %8 = tpu.matmul %6, %7, %cst_5 {dimension_numbers = #tpu.dot_dimension_numbers<[1], [0], [0], [1], [0, 0, 1, 1], [], []>, precision = #tpu.contract_precision<fp32>} : vector<8x64xf32>, vector<64x8xf32>, vector<8x8xf32> -> vector<8x8xf32>
    %9 = tpu.reciprocal %8 {approx = true} : vector<8x8xf32> -> vector<8x8xf32>
    %10 = arith.mulf %8, %9 : vector<8x8xf32>
    %cst_6 = arith.constant 2.000000e+00 : f32
    %11 = vector.broadcast %cst_6 : f32 to vector<8x8xf32>
    %12 = arith.subf %11, %10 : vector<8x8xf32>
    %13 = arith.mulf %9, %12 : vector<8x8xf32>
    %c0_7 = arith.constant 0 : index
    %c0_8 = arith.constant 0 : index
    %c0_9 = arith.constant 0 : index
    %c0_10 = arith.constant 0 : index
    %14 = vector.load %arg3[%c0_7, %c0_8, %c0_9, %c0_10] : memref<1x4x8x64xf32, #tpu.memory_space<vmem>>, vector<1x4x1x64xf32>
    %15 = vector.shape_cast %14 : vector<1x4x1x64xf32> to vector<4x64xf32>
    %16 = vector.extract_strided_slice %6 {offsets = [0, 0], sizes = [1, 64], strides = [1, 1]} : vector<8x64xf32> to vector<1x64xf32>
    %17 = vector.broadcast %16 : vector<1x64xf32> to vector<4x64xf32>
    %18 = arith.mulf %15, %17 : vector<4x64xf32>
    %cst_11 = arith.constant dense<0.000000e+00> : vector<4x8xf32>
    %19 = tpu.matmul %18, %7, %cst_11 {dimension_numbers = #tpu.dot_dimension_numbers<[1], [0], [0], [1], [0, 0, 1, 1], [], []>, precision = #tpu.contract_precision<fp32>} : vector<4x64xf32>, vector<64x8xf32>, vector<4x8xf32> -> vector<4x8xf32>
    %20 = vector.extract_strided_slice %13 {offsets = [0, 0], sizes = [1, 8], strides = [1, 1]} : vector<8x8xf32> to vector<1x8xf32>
    %21 = vector.broadcast %20 : vector<1x8xf32> to vector<4x8xf32>
    %22 = arith.mulf %19, %21 : vector<4x8xf32>
    %c0_12 = arith.constant 0 : index
    %c0_13 = arith.constant 0 : index
    %c0_14 = arith.constant 0 : index
    %c0_15 = arith.constant 0 : index
    %23 = vector.load %arg6[%c0_12, %c0_13, %c0_14, %c0_15] : memref<1x4x8x8xf32, #tpu.memory_space<vmem>>, vector<1x4x1x8xf32>
    %24 = vector.shape_cast %23 : vector<1x4x1x8xf32> to vector<4x8xf32>
    %25 = vector.shape_cast %22 : vector<4x8xf32> to vector<1x4x1x8xf32>
    tpu.vector_store %arg6[%c0_12, %c0_13, %c0_14, %c0_15], %25 {strides = array<i32>} : memref<1x4x8x8xf32, #tpu.memory_space<vmem>>, vector<1x4x1x8xf32>,
    %c0_16 = arith.constant 0 : index
    %c0_17 = arith.constant 0 : index
    %c1 = arith.constant 1 : index
    %c0_18 = arith.constant 0 : index
    %26 = vector.load %arg3[%c0_16, %c0_17, %c1, %c0_18] : memref<1x4x8x64xf32, #tpu.memory_space<vmem>>, vector<1x4x1x64xf32>
    %27 = vector.shape_cast %26 : vector<1x4x1x64xf32> to vector<4x64xf32>
    %28 = vector.extract_strided_slice %6 {offsets = [1, 0], sizes = [1, 64], strides = [1, 1]} : vector<8x64xf32> to vector<1x64xf32>
    %29 = vector.broadcast %28 : vector<1x64xf32> to vector<4x64xf32>
    %30 = arith.mulf %27, %29 : vector<4x64xf32>
    %cst_19 = arith.constant dense<0.000000e+00> : vector<4x8xf32>
    %31 = tpu.matmul %30, %7, %cst_19 {dimension_numbers = #tpu.dot_dimension_numbers<[1], [0], [0], [1], [0, 0, 1, 1], [], []>, precision = #tpu.contract_precision<fp32>} : vector<4x64xf32>, vector<64x8xf32>, vector<4x8xf32> -> vector<4x8xf32>
    %32 = vector.extract_strided_slice %13 {offsets = [1, 0], sizes = [1, 8], strides = [1, 1]} : vector<8x8xf32> to vector<1x8xf32>
    %33 = vector.broadcast %32 : vector<1x8xf32> to vector<4x8xf32>
    %34 = arith.mulf %31, %33 : vector<4x8xf32>
    %c0_20 = arith.constant 0 : index
    %c0_21 = arith.constant 0 : index
    %c1_22 = arith.constant 1 : index
    %c0_23 = arith.constant 0 : index
    %35 = vector.load %arg6[%c0_20, %c0_21, %c1_22, %c0_23] : memref<1x4x8x8xf32, #tpu.memory_space<vmem>>, vector<1x4x1x8xf32>
    %36 = vector.shape_cast %35 : vector<1x4x1x8xf32> to vector<4x8xf32>
    %37 = vector.shape_cast %34 : vector<4x8xf32> to vector<1x4x1x8xf32>
    tpu.vector_store %arg6[%c0_20, %c0_21, %c1_22, %c0_23], %37 {strides = array<i32>} : memref<1x4x8x8xf32, #tpu.memory_space<vmem>>, vector<1x4x1x8xf32>,
    %c0_24 = arith.constant 0 : index
    %c0_25 = arith.constant 0 : index
    %c2 = arith.constant 2 : index
    %c0_26 = arith.constant 0 : index
    %38 = vector.load %arg3[%c0_24, %c0_25, %c2, %c0_26] : memref<1x4x8x64xf32, #tpu.memory_space<vmem>>, vector<1x4x1x64xf32>
    %39 = vector.shape_cast %38 : vector<1x4x1x64xf32> to vector<4x64xf32>
    %40 = vector.extract_strided_slice %6 {offsets = [2, 0], sizes = [1, 64], strides = [1, 1]} : vector<8x64xf32> to vector<1x64xf32>
    %41 = vector.broadcast %40 : vector<1x64xf32> to vector<4x64xf32>
    %42 = arith.mulf %39, %41 : vector<4x64xf32>
    %cst_27 = arith.constant dense<0.000000e+00> : vector<4x8xf32>
    %43 = tpu.matmul %42, %7, %cst_27 {dimension_numbers = #tpu.dot_dimension_numbers<[1], [0], [0], [1], [0, 0, 1, 1], [], []>, precision = #tpu.contract_precision<fp32>} : vector<4x64xf32>, vector<64x8xf32>, vector<4x8xf32> -> vector<4x8xf32>
    %44 = vector.extract_strided_slice %13 {offsets = [2, 0], sizes = [1, 8], strides = [1, 1]} : vector<8x8xf32> to vector<1x8xf32>
    %45 = vector.broadcast %44 : vector<1x8xf32> to vector<4x8xf32>
    %46 = arith.mulf %43, %45 : vector<4x8xf32>
    %c0_28 = arith.constant 0 : index
    %c0_29 = arith.constant 0 : index
    %c2_30 = arith.constant 2 : index
    %c0_31 = arith.constant 0 : index
    %47 = vector.load %arg6[%c0_28, %c0_29, %c2_30, %c0_31] : memref<1x4x8x8xf32, #tpu.memory_space<vmem>>, vector<1x4x1x8xf32>
    %48 = vector.shape_cast %47 : vector<1x4x1x8xf32> to vector<4x8xf32>
    %49 = vector.shape_cast %46 : vector<4x8xf32> to vector<1x4x1x8xf32>
    tpu.vector_store %arg6[%c0_28, %c0_29, %c2_30, %c0_31], %49 {strides = array<i32>} : memref<1x4x8x8xf32, #tpu.memory_space<vmem>>, vector<1x4x1x8xf32>,
    %c0_32 = arith.constant 0 : index
    %c0_33 = arith.constant 0 : index
    %c3 = arith.constant 3 : index
    %c0_34 = arith.constant 0 : index
    %50 = vector.load %arg3[%c0_32, %c0_33, %c3, %c0_34] : memref<1x4x8x64xf32, #tpu.memory_space<vmem>>, vector<1x4x1x64xf32>
    %51 = vector.shape_cast %50 : vector<1x4x1x64xf32> to vector<4x64xf32>
    %52 = vector.extract_strided_slice %6 {offsets = [3, 0], sizes = [1, 64], strides = [1, 1]} : vector<8x64xf32> to vector<1x64xf32>
    %53 = vector.broadcast %52 : vector<1x64xf32> to vector<4x64xf32>
    %54 = arith.mulf %51, %53 : vector<4x64xf32>
    %cst_35 = arith.constant dense<0.000000e+00> : vector<4x8xf32>
    %55 = tpu.matmul %54, %7, %cst_35 {dimension_numbers = #tpu.dot_dimension_numbers<[1], [0], [0], [1], [0, 0, 1, 1], [], []>, precision = #tpu.contract_precision<fp32>} : vector<4x64xf32>, vector<64x8xf32>, vector<4x8xf32> -> vector<4x8xf32>
    %56 = vector.extract_strided_slice %13 {offsets = [3, 0], sizes = [1, 8], strides = [1, 1]} : vector<8x8xf32> to vector<1x8xf32>
    %57 = vector.broadcast %56 : vector<1x8xf32> to vector<4x8xf32>
    %58 = arith.mulf %55, %57 : vector<4x8xf32>
    %c0_36 = arith.constant 0 : index
    %c0_37 = arith.constant 0 : index
    %c3_38 = arith.constant 3 : index
    %c0_39 = arith.constant 0 : index
    %59 = vector.load %arg6[%c0_36, %c0_37, %c3_38, %c0_39] : memref<1x4x8x8xf32, #tpu.memory_space<vmem>>, vector<1x4x1x8xf32>
    %60 = vector.shape_cast %59 : vector<1x4x1x8xf32> to vector<4x8xf32>
    %61 = vector.shape_cast %58 : vector<4x8xf32> to vector<1x4x1x8xf32>
    tpu.vector_store %arg6[%c0_36, %c0_37, %c3_38, %c0_39], %61 {strides = array<i32>} : memref<1x4x8x8xf32, #tpu.memory_space<vmem>>, vector<1x4x1x8xf32>,
    %c0_40 = arith.constant 0 : index
    %c0_41 = arith.constant 0 : index
    %c4 = arith.constant 4 : index
    %c0_42 = arith.constant 0 : index
    %62 = vector.load %arg3[%c0_40, %c0_41, %c4, %c0_42] : memref<1x4x8x64xf32, #tpu.memory_space<vmem>>, vector<1x4x1x64xf32>
    %63 = vector.shape_cast %62 : vector<1x4x1x64xf32> to vector<4x64xf32>
    %64 = vector.extract_strided_slice %6 {offsets = [4, 0], sizes = [1, 64], strides = [1, 1]} : vector<8x64xf32> to vector<1x64xf32>
    %65 = vector.broadcast %64 : vector<1x64xf32> to vector<4x64xf32>
    %66 = arith.mulf %63, %65 : vector<4x64xf32>
    %cst_43 = arith.constant dense<0.000000e+00> : vector<4x8xf32>
    %67 = tpu.matmul %66, %7, %cst_43 {dimension_numbers = #tpu.dot_dimension_numbers<[1], [0], [0], [1], [0, 0, 1, 1], [], []>, precision = #tpu.contract_precision<fp32>} : vector<4x64xf32>, vector<64x8xf32>, vector<4x8xf32> -> vector<4x8xf32>
    %68 = vector.extract_strided_slice %13 {offsets = [4, 0], sizes = [1, 8], strides = [1, 1]} : vector<8x8xf32> to vector<1x8xf32>
    %69 = vector.broadcast %68 : vector<1x8xf32> to vector<4x8xf32>
    %70 = arith.mulf %67, %69 : vector<4x8xf32>
    %c0_44 = arith.constant 0 : index
    %c0_45 = arith.constant 0 : index
    %c4_46 = arith.constant 4 : index
    %c0_47 = arith.constant 0 : index
    %71 = vector.load %arg6[%c0_44, %c0_45, %c4_46, %c0_47] : memref<1x4x8x8xf32, #tpu.memory_space<vmem>>, vector<1x4x1x8xf32>
    %72 = vector.shape_cast %71 : vector<1x4x1x8xf32> to vector<4x8xf32>
    %73 = vector.shape_cast %70 : vector<4x8xf32> to vector<1x4x1x8xf32>
    tpu.vector_store %arg6[%c0_44, %c0_45, %c4_46, %c0_47], %73 {strides = array<i32>} : memref<1x4x8x8xf32, #tpu.memory_space<vmem>>, vector<1x4x1x8xf32>,
    %c0_48 = arith.constant 0 : index
    %c0_49 = arith.constant 0 : index
    %c5 = arith.constant 5 : index
    %c0_50 = arith.constant 0 : index
    %74 = vector.load %arg3[%c0_48, %c0_49, %c5, %c0_50] : memref<1x4x8x64xf32, #tpu.memory_space<vmem>>, vector<1x4x1x64xf32>
    %75 = vector.shape_cast %74 : vector<1x4x1x64xf32> to vector<4x64xf32>
    %76 = vector.extract_strided_slice %6 {offsets = [5, 0], sizes = [1, 64], strides = [1, 1]} : vector<8x64xf32> to vector<1x64xf32>
    %77 = vector.broadcast %76 : vector<1x64xf32> to vector<4x64xf32>
    %78 = arith.mulf %75, %77 : vector<4x64xf32>
    %cst_51 = arith.constant dense<0.000000e+00> : vector<4x8xf32>
    %79 = tpu.matmul %78, %7, %cst_51 {dimension_numbers = #tpu.dot_dimension_numbers<[1], [0], [0], [1], [0, 0, 1, 1], [], []>, precision = #tpu.contract_precision<fp32>} : vector<4x64xf32>, vector<64x8xf32>, vector<4x8xf32> -> vector<4x8xf32>
    %80 = vector.extract_strided_slice %13 {offsets = [5, 0], sizes = [1, 8], strides = [1, 1]} : vector<8x8xf32> to vector<1x8xf32>
    %81 = vector.broadcast %80 : vector<1x8xf32> to vector<4x8xf32>
    %82 = arith.mulf %79, %81 : vector<4x8xf32>
    %c0_52 = arith.constant 0 : index
    %c0_53 = arith.constant 0 : index
    %c5_54 = arith.constant 5 : index
    %c0_55 = arith.constant 0 : index
    %83 = vector.load %arg6[%c0_52, %c0_53, %c5_54, %c0_55] : memref<1x4x8x8xf32, #tpu.memory_space<vmem>>, vector<1x4x1x8xf32>
    %84 = vector.shape_cast %83 : vector<1x4x1x8xf32> to vector<4x8xf32>
    %85 = vector.shape_cast %82 : vector<4x8xf32> to vector<1x4x1x8xf32>
    tpu.vector_store %arg6[%c0_52, %c0_53, %c5_54, %c0_55], %85 {strides = array<i32>} : memref<1x4x8x8xf32, #tpu.memory_space<vmem>>, vector<1x4x1x8xf32>,
    %c0_56 = arith.constant 0 : index
    %c0_57 = arith.constant 0 : index
    %c6 = arith.constant 6 : index
    %c0_58 = arith.constant 0 : index
    %86 = vector.load %arg3[%c0_56, %c0_57, %c6, %c0_58] : memref<1x4x8x64xf32, #tpu.memory_space<vmem>>, vector<1x4x1x64xf32>
    %87 = vector.shape_cast %86 : vector<1x4x1x64xf32> to vector<4x64xf32>
    %88 = vector.extract_strided_slice %6 {offsets = [6, 0], sizes = [1, 64], strides = [1, 1]} : vector<8x64xf32> to vector<1x64xf32>
    %89 = vector.broadcast %88 : vector<1x64xf32> to vector<4x64xf32>
    %90 = arith.mulf %87, %89 : vector<4x64xf32>
    %cst_59 = arith.constant dense<0.000000e+00> : vector<4x8xf32>
    %91 = tpu.matmul %90, %7, %cst_59 {dimension_numbers = #tpu.dot_dimension_numbers<[1], [0], [0], [1], [0, 0, 1, 1], [], []>, precision = #tpu.contract_precision<fp32>} : vector<4x64xf32>, vector<64x8xf32>, vector<4x8xf32> -> vector<4x8xf32>
    %92 = vector.extract_strided_slice %13 {offsets = [6, 0], sizes = [1, 8], strides = [1, 1]} : vector<8x8xf32> to vector<1x8xf32>
    %93 = vector.broadcast %92 : vector<1x8xf32> to vector<4x8xf32>
    %94 = arith.mulf %91, %93 : vector<4x8xf32>
    %c0_60 = arith.constant 0 : index
    %c0_61 = arith.constant 0 : index
    %c6_62 = arith.constant 6 : index
    %c0_63 = arith.constant 0 : index
    %95 = vector.load %arg6[%c0_60, %c0_61, %c6_62, %c0_63] : memref<1x4x8x8xf32, #tpu.memory_space<vmem>>, vector<1x4x1x8xf32>
    %96 = vector.shape_cast %95 : vector<1x4x1x8xf32> to vector<4x8xf32>
    %97 = vector.shape_cast %94 : vector<4x8xf32> to vector<1x4x1x8xf32>
    tpu.vector_store %arg6[%c0_60, %c0_61, %c6_62, %c0_63], %97 {strides = array<i32>} : memref<1x4x8x8xf32, #tpu.memory_space<vmem>>, vector<1x4x1x8xf32>,
    %c0_64 = arith.constant 0 : index
    %c0_65 = arith.constant 0 : index
    %c7 = arith.constant 7 : index
    %c0_66 = arith.constant 0 : index
    %98 = vector.load %arg3[%c0_64, %c0_65, %c7, %c0_66] : memref<1x4x8x64xf32, #tpu.memory_space<vmem>>, vector<1x4x1x64xf32>
    %99 = vector.shape_cast %98 : vector<1x4x1x64xf32> to vector<4x64xf32>
    %100 = vector.extract_strided_slice %6 {offsets = [7, 0], sizes = [1, 64], strides = [1, 1]} : vector<8x64xf32> to vector<1x64xf32>
    %101 = vector.broadcast %100 : vector<1x64xf32> to vector<4x64xf32>
    %102 = arith.mulf %99, %101 : vector<4x64xf32>
    %cst_67 = arith.constant dense<0.000000e+00> : vector<4x8xf32>
    %103 = tpu.matmul %102, %7, %cst_67 {dimension_numbers = #tpu.dot_dimension_numbers<[1], [0], [0], [1], [0, 0, 1, 1], [], []>, precision = #tpu.contract_precision<fp32>} : vector<4x64xf32>, vector<64x8xf32>, vector<4x8xf32> -> vector<4x8xf32>
    %104 = vector.extract_strided_slice %13 {offsets = [7, 0], sizes = [1, 8], strides = [1, 1]} : vector<8x8xf32> to vector<1x8xf32>
    %105 = vector.broadcast %104 : vector<1x8xf32> to vector<4x8xf32>
    %106 = arith.mulf %103, %105 : vector<4x8xf32>
    %c0_68 = arith.constant 0 : index
    %c0_69 = arith.constant 0 : index
    %c7_70 = arith.constant 7 : index
    %c0_71 = arith.constant 0 : index
    %107 = vector.load %arg6[%c0_68, %c0_69, %c7_70, %c0_71] : memref<1x4x8x8xf32, #tpu.memory_space<vmem>>, vector<1x4x1x8xf32>
    %108 = vector.shape_cast %107 : vector<1x4x1x8xf32> to vector<4x8xf32>
    %109 = vector.shape_cast %106 : vector<4x8xf32> to vector<1x4x1x8xf32>
    tpu.vector_store %arg6[%c0_68, %c0_69, %c7_70, %c0_71], %109 {strides = array<i32>} : memref<1x4x8x8xf32, #tpu.memory_space<vmem>>, vector<1x4x1x8xf32>,
    return
  }
  func.func @transform_0(%arg0: i32, %arg1: i32, %arg2: i32) -> (i32, i32, i32, i32) {
    %c0_i32 = arith.constant 0 : i32
    %c0_i32_0 = arith.constant 0 : i32
    return %arg0, %arg2, %arg1, %c0_i32 : i32, i32, i32, i32
  }
  func.func @transform_1(%arg0: i32, %arg1: i32, %arg2: i32) -> (i32, i32, i32, i32) {
    %c0_i32 = arith.constant 0 : i32
    %c0_i32_0 = arith.constant 0 : i32
    %c0_i32_1 = arith.constant 0 : i32
    return %arg0, %c0_i32, %arg1, %c0_i32_0 : i32, i32, i32, i32
  }
  func.func @transform_2(%arg0: i32, %arg1: i32, %arg2: i32) -> (i32, i32) {
    %c0_i32 = arith.constant 0 : i32
    %c0_i32_0 = arith.constant 0 : i32
    %c0_i32_1 = arith.constant 0 : i32
    return %c0_i32, %c0_i32_0 : i32, i32
  }
  func.func @transform_3(%arg0: i32, %arg1: i32, %arg2: i32) -> (i32, i32, i32, i32) {
    %c0_i32 = arith.constant 0 : i32
    %c0_i32_0 = arith.constant 0 : i32
    return %arg0, %arg2, %arg1, %c0_i32 : i32, i32, i32, i32
  }
}

</mosaic_0001>

<llo_original>
// kernel: tpu_custom_call.1
$region0: #{tpu_custom_call.1}
  #allocation0 [shape = 'u32[]', space=smem, size = 0x4, offset = 0x4, fixed_abs, tag = 'smem constant byte address 0x4 - core index']
  #allocation1 [shape = 'u32[72,128]{1,0:T(1,128)}', space=vmem, size = 0x9000, scoped, tag = 'internal scratch']
  %s0 = inlined_call_operand.vmem [shape: f32[2,4,8,64], index: 0, kind: input, shape index: {}]
  %s1 = inlined_call_operand.hbm [shape: f32[2,1,8,64], index: 1, kind: input, shape index: {}]
  %s2 = inlined_call_operand.vmem [shape: f32[64,8], index: 2, kind: input, shape index: {}]
  %s3 = inlined_call_operand.hbm [shape: f32[2,4,8,8], index: 3, kind: output, shape index: {}]
  %s4 = sld [smem:[#allocation0]]
  $region49: #{tpu_custom_call.1} parent=0
    _
  %s6 = ssub.s32 1, %s4
  %s7 = scalar_select 0, %s6, %s4
  $region1: #{tpu_custom_call.1} parent=0
    #allocation2 [shape = 'u8[8192]{0}', space=vmem, size = 0x2000, scoped, tag = 'input window, operand 1']
    #allocation3 [shape = 's32[2]{0}', space=sflag, size = 0x8, scoped, tag = 'scoped memory for tpu_custom_call.1']
    #allocation4 [shape = 's32[2]{0}', space=sflag, size = 0x8, scoped, tag = 'scoped memory for tpu_custom_call.1']
    #allocation5 [shape = 'u8[32768]{0}', space=vmem, size = 0x8000, scoped, tag = 'output window, operand 0']
    %8 = vsyncpa [#allocation3], 0
    %s9 = scalar_lea.sflag [#allocation3], 1
    %10 = vsyncpa %s9, 0
    %11 = vsyncpa [#allocation4], 0
    %s12 = scalar_lea.sflag [#allocation4], 1
    %13 = vsyncpa %s12, 0
    loop: start=0, step=1, limit=4
    $region2: #{tpu_custom_call.1} parent=1 // loop_pre_header
      _
    $region3: #{tpu_custom_call.1} parent=1 // loop_header
      %s15 = sphi 0, %s19
      %p16 = scmp.ge.s32.totalorder %s15, 4
      %s22 = sphi 0, %s41
      %s23 = sphi 0, %s37
      %s24 = sphi 0, %s33
      %s25 = sphi 0, %s22
      %s26 = sphi 0, %s23
      %s27 = sphi 0, %s24
      %s28 = sphi 0, %s25
      %s29 = sphi 0, %s26
      %s30 = sphi 0, %s27
      %s48 = sphi 0, %s50
      %s51 = sphi 0, %s48
      %s52 = sphi 0, %s51
      %s68 = sphi 0, %s52
      %s76 = sphi 0, %s78
      %s79 = sphi 0, %s76
      %s80 = sphi 0, %s79
      %s96 = sphi 0, %s80
      %s100 = sphi 0, %s100
      %s102 = sphi 0, %s100
      %s103 = sphi 0, %s102
      %s117 = sphi 0, %s103
      %s127 = sphi 0, %s129
      %s130 = sphi 0, %s127
      %s131 = sphi 0, %s130
      %s147 = sphi 0, %s131
    $region4: #{tpu_custom_call.1} parent=1 // loop_header_branch
      %18 = sbr.rel (%p16) target = $region8
    $region5: #{tpu_custom_call.1} parent=1 // loop_body
      %s20 = ssub.s32 %s15, 1
      %s21 = ssub.s32 %s15, 2
      %s31 = sadd.s32 1, %s24
      %p32 = scmp.ge.s32.totalorder %s31, 1
      %s33 = scalar_select %p32, 0, %s31
      %s34 = sadd.s32 1, %s23
      %s35 = scalar_select %p32, %s34, %s23
      %p36 = scmp.ge.s32.totalorder %s35, 1
      %s37 = scalar_select %p36, 0, %s35
      %s38 = sadd.s32 1, %s22
      %s39 = scalar_select %p36, %s38, %s22
      %p40 = scmp.ge.s32.totalorder %s39, 2
      %s41 = scalar_select %p40, 0, %s39
      %s42 = ssub.s32 %s22, %s41
      %s43 = ssub.s32 %s24, %s33
      %s44 = sor.u32 %s42, %s43
      %s45 = ssub.s32 %s23, %s37
      %s46 = sor.u32 %s44, %s45
      %p47 = scmp.eq.s32.totalorder %s46, 0
      %s49 = sadd.s32 %s48, 1
      %s50 = scalar_select %p47, %s48, %s49
      %p53 = pneg %p47
      %p54 = scmp.eq.s32.totalorder %s15, 1
      %p55 = por %p53, %p54
      %p56 = scmp.ne.s32.totalorder %s48, %s51
      %p57 = scmp.eq.s32.totalorder %s15, 0
      %p58 = por %p56, %p57
      %p59 = scmp.ne.s32.totalorder %s48, %s51
      %p60 = scmp.eq.s32.totalorder %s20, 1
      %p61 = por %p59, %p60
      %p62 = scmp.ne.s32.totalorder %s51, %s52
      %p63 = scmp.eq.s32.totalorder %s20, 0
      %p64 = por %p62, %p63
      %p65 = scmp.ne.s32.totalorder %s51, %s52
      %p66 = scmp.eq.s32.totalorder %s21, 1
      %p67 = por %p65, %p66
      %p69 = scmp.ne.s32.totalorder %s52, %s68
      %p70 = scmp.eq.s32.totalorder %s21, 0
      %p71 = por %p69, %p70
      %s72 = ssub.s32 %s22, %s41
      %s73 = ssub.s32 %s23, %s37
      %s74 = sor.u32 %s72, %s73
      %p75 = scmp.eq.s32.totalorder %s74, 0
      %s77 = sadd.s32 %s76, 1
      %s78 = scalar_select %p75, %s76, %s77
      %p81 = pneg %p75
      %p82 = scmp.eq.s32.totalorder %s15, 1
      %p83 = por %p81, %p82
      %p84 = scmp.ne.s32.totalorder %s76, %s79
      %p85 = scmp.eq.s32.totalorder %s15, 0
      %p86 = por %p84, %p85
      %p87 = scmp.ne.s32.totalorder %s76, %s79
      %p88 = scmp.eq.s32.totalorder %s20, 1
      %p89 = por %p87, %p88
      %p90 = scmp.ne.s32.totalorder %s79, %s80
      %p91 = scmp.eq.s32.totalorder %s20, 0
      %p92 = por %p90, %p91
      %p93 = scmp.ne.s32.totalorder %s79, %s80
      %p94 = scmp.eq.s32.totalorder %s21, 1
      %p95 = por %p93, %p94
      %p97 = scmp.ne.s32.totalorder %s80, %s96
      %p98 = scmp.eq.s32.totalorder %s21, 0
      %p99 = por %p97, %p98
      %s101 = sadd.s32 %s100, 1
      %p104 = scmp.eq.s32.totalorder %s15, 1
      %p105 = scmp.ne.s32.totalorder %s100, %s102
      %p106 = scmp.eq.s32.totalorder %s15, 0
      %p107 = por %p105, %p106
      %p108 = scmp.ne.s32.totalorder %s100, %s102
      %p109 = scmp.eq.s32.totalorder %s20, 1
      %p110 = por %p108, %p109
      %p111 = scmp.ne.s32.totalorder %s102, %s103
      %p112 = scmp.eq.s32.totalorder %s20, 0
      %p113 = por %p111, %p112
      %p114 = scmp.ne.s32.totalorder %s102, %s103
      %p115 = scmp.eq.s32.totalorder %s21, 1
      %p116 = por %p114, %p115
      %p118 = scmp.ne.s32.totalorder %s103, %s117
      %p119 = scmp.eq.s32.totalorder %s21, 0
      %p120 = por %p118, %p119
      %s121 = ssub.s32 %s22, %s41
      %s122 = ssub.s32 %s24, %s33
      %s123 = sor.u32 %s121, %s122
      %s124 = ssub.s32 %s23, %s37
      %s125 = sor.u32 %s123, %s124
      %p126 = scmp.eq.s32.totalorder %s125, 0
      %s128 = sadd.s32 %s127, 1
      %s129 = scalar_select %p126, %s127, %s128
      %p132 = pneg %p126
      %p133 = scmp.eq.s32.totalorder %s15, 1
      %p134 = por %p132, %p133
      %p135 = scmp.ne.s32.totalorder %s127, %s130
      %p136 = scmp.eq.s32.totalorder %s15, 0
      %p137 = por %p135, %p136
      %p138 = scmp.ne.s32.totalorder %s127, %s130
      %p139 = scmp.eq.s32.totalorder %s20, 1
      %p140 = por %p138, %p139
      %p141 = scmp.ne.s32.totalorder %s130, %s131
      %p142 = scmp.eq.s32.totalorder %s20, 0
      %p143 = por %p141, %p142
      %p144 = scmp.ne.s32.totalorder %s130, %s131
      %p145 = scmp.eq.s32.totalorder %s21, 1
      %p146 = por %p144, %p145
      %p148 = scmp.ne.s32.totalorder %s131, %s147
      %p149 = scmp.eq.s32.totalorder %s21, 0
      %p150 = por %p148, %p149
      %p151 = scmp.le.s32.totalorder 1, %s15
      %p152 = scmp.lt.s32.totalorder %s15, 3
      %p153 = pnand %p151, %p152
      %p154 = pneg %p153
      // Predicated region
      $region9: #{tpu_custom_call.1} parent=5 // pred_check
        _
      $region10: #{tpu_custom_call.1} parent=5 // pred_check_branch
        %156 = sbr.rel (%p153) target = $region12
      $region11: #{tpu_custom_call.1} parent=5 // pred_region
        %s157 = ssub.s32 %s15, 1
        // Predicated region
        $region13: #{tpu_custom_call.1} parent=11 // pred_check
          %p158 = pneg %p113
        $region14: #{tpu_custom_call.1} parent=11 // pred_check_branch
          %160 = sbr.rel (%p158) target = $region16
        $region15: #{tpu_custom_call.1} parent=11 // pred_region
          _
        $region16: #{tpu_custom_call.1} parent=11 // pred_fallthru
          _
      $region12: #{tpu_custom_call.1} parent=5 // pred_fallthru
        _
      %p161 = scmp.lt.s32.totalorder %s15, 2
      // Predicated region
      $region17: #{tpu_custom_call.1} parent=5 // pred_check
        %p162 = pneg %p161
      $region18: #{tpu_custom_call.1} parent=5 // pred_check_branch
        %164 = sbr.rel (%p162) target = $region20
      $region19: #{tpu_custom_call.1} parent=5 // pred_region
        // Predicated region
        $region21: #{tpu_custom_call.1} parent=19 // pred_check
          %p165 = pneg %p58
        $region22: #{tpu_custom_call.1} parent=19 // pred_check_branch
          %167 = sbr.rel (%p165) target = $region24
        $region23: #{tpu_custom_call.1} parent=19 // pred_region
          %s168 = smul.u32 4, %s24
          %p169 = scmp.lt.s32.totalorder %s22, 1
          %s170 = scalar_select %p169, %s22, 1
          %p171 = scmp.lt.s32.totalorder %s168, 3
          %s172 = scalar_select %p171, %s168, 3
          %p173 = scmp.lt.s32.totalorder %s23, 0
          %s174 = scalar_select %p173, %s23, 0
          %s175 = sadd.s32 %s174, %s172
          %s176 = smul.addr %s170, 4
          %s177 = sadd.s32 %s175, %s176
          %s178 = smul.addr %s177, 8
          %s179 = scalar_lea.vmem %s0, %s178
          %s180 = smul.u32 4, %s24
        $region24: #{tpu_custom_call.1} parent=19 // pred_fallthru
          _
        // Predicated region
        $region25: #{tpu_custom_call.1} parent=19 // pred_check
          %p181 = pneg %p86
        $region26: #{tpu_custom_call.1} parent=19 // pred_check_branch
          %183 = sbr.rel (%p181) target = $region28
        $region27: #{tpu_custom_call.1} parent=19 // pred_region
          %s184 = sand.u32 %s76, 1
          %s185 = scalar_lea.sflag [#allocation3], %s184
          %s186 = sand.u32 %s76, 1
          %s187 = smul.addr %s186, 8
          %s188 = scalar_lea.vmem [#allocation2], %s187
          %190 = vsyncadd %s185, 0
          %s191 = sadd.s32 %s23, %s22
          %s192 = smul.addr %s191, 8
          %s193 = scalar_lea.hbm %s1, %s192
          %s195 = sshll.u32 %s193, 4
          %s196 = int_to_ptr.hbm [resolvable:$true] %s195
          %s197 = sshll.u32 %s188, 4
          %s198 = int_to_ptr.vmem [resolvable:$true] %s197
          %200 = dma.hbm_to_vmem [thread:$0]  %s196, 128, %s198, %s185
        $region28: #{tpu_custom_call.1} parent=19 // pred_fallthru
          _
      $region20: #{tpu_custom_call.1} parent=5 // pred_fallthru
        _
      %p201 = scmp.le.s32.totalorder 1, %s15
      %p202 = scmp.lt.s32.totalorder %s15, 3
      %p203 = pnand %p201, %p202
      %p204 = pneg %p203
      // Predicated region
      $region29: #{tpu_custom_call.1} parent=5 // pred_check
        _
      $region30: #{tpu_custom_call.1} parent=5 // pred_check_branch
        %206 = sbr.rel (%p203) target = $region32
      $region31: #{tpu_custom_call.1} parent=5 // pred_region
        %s207 = ssub.s32 %s15, 1
        %s208 = sand.u32 %s79, 1
        %s209 = scalar_lea.sflag [#allocation3], %s208
        %s210 = sand.u32 %s79, 1
        %s211 = smul.addr %s210, 8
        %s212 = scalar_lea.vmem [#allocation2], %s211
        // Predicated region
        $region33: #{tpu_custom_call.1} parent=31 // pred_check
          %p213 = pneg %p92
        $region34: #{tpu_custom_call.1} parent=31 // pred_check_branch
          %215 = sbr.rel (%p213) target = $region36
        $region35: #{tpu_custom_call.1} parent=31 // pred_region
          %217 = dma.done %s209, 128
        $region36: #{tpu_custom_call.1} parent=31 // pred_fallthru
          _
        %s218 = smul.u32 4, %s27
        %p219 = scmp.lt.s32.totalorder %s25, 1
        %s220 = scalar_select %p219, %s25, 1
        %p221 = scmp.lt.s32.totalorder %s218, 3
        %s222 = scalar_select %p221, %s218, 3
        %p223 = scmp.lt.s32.totalorder %s26, 0
        %s224 = scalar_select %p223, %s26, 0
        %s225 = sadd.s32 %s224, %s222
        %s226 = smul.addr %s220, 4
        %s227 = sadd.s32 %s225, %s226
        %s228 = smul.addr %s227, 8
        %s229 = scalar_lea.vmem %s0, %s228
        %p230 = pneg %p64
        %p231 = pneg %p61
        %s232 = sand.u32 %s79, 1
        %s233 = scalar_lea.sflag [#allocation3], %s232
        %s234 = sand.u32 %s79, 1
        %s235 = smul.addr %s234, 8
        %s236 = scalar_lea.vmem [#allocation2], %s235
        %p237 = pneg %p92
        %p238 = pneg %p89
        %p239 = pneg %p113
        %p240 = pneg %p110
        %p241 = pneg %p143
        %p242 = pneg %p140
        %s243 = sand.u32 %s130, 1
        %s244 = scalar_lea.sflag [#allocation4], %s243
        %s245 = sand.u32 %s130, 1
        %s246 = smul.addr %s245, 32
        %s247 = scalar_lea.vmem [#allocation5], %s246
        %s248 = smul.u32 4, %s27
        %p249 = scmp.lt.s32.totalorder %s25, 1
        %s250 = scalar_select %p249, %s25, 1
        %p251 = scmp.lt.s32.totalorder %s248, 3
        %s252 = scalar_select %p251, %s248, 3
        %p253 = scmp.lt.s32.totalorder %s26, 0
        %s254 = scalar_select %p253, %s26, 0
        %s255 = sadd.s32 %s254, %s252
        %s256 = smul.addr %s250, 4
        %s257 = sadd.s32 %s255, %s256
        %s258 = smul.addr %s257, 8
        %s259 = scalar_lea.vmem %s0, %s258
        %s260 = smul.u32 4, %s27
        %s261 = smul.u32 4, %s27
        %v262 = vld [vmem:[%s212] sm:$0xff]
        %vm263 = vcmask 523264
        %v264 = vsel %vm263, %v262, -inf
        %265 = vmax.xlane.f32.xlu0 %v264
        %v266 = vpop.xlane.xlu0 %265
        %v267 = vsub.f32 %v262, %v266
        %v268 = vmul.f32 %v267, 1.442695
        %v269 = vpow.pop %v268
        %v270 = vld [vmem:[%s2] sm:$0xff]
        %v271 = vld [vmem:[%s2 + $0x8] sm:$0xff]
        %v272 = vld [vmem:[%s2 + $0x10] sm:$0xff]
        %v273 = vld [vmem:[%s2 + $0x18] sm:$0xff]
        %v274 = vld [vmem:[%s2 + $0x20] sm:$0xff]
        %v275 = vld [vmem:[%s2 + $0x28] sm:$0xff]
        %v276 = vld [vmem:[%s2 + $0x30] sm:$0xff]
        %v277 = vld [vmem:[%s2 + $0x38] sm:$0xff]
        %v279 = vsel %vm263, %v269, 0
        %281 = vmatpush.msra.mxu0 0.0
        %282 = vmatpush.msra.mxu0 0.0
        %283 = vmatpush.msra.mxu0 0.0
        %284 = vmatpush.msra.mxu0 0.0
        %285 = vmatpush.msra.mxu0 0.0
        %286 = vmatpush.msra.mxu0 0.0
        %287 = vmatpush.msra.mxu0 0.0
        %288 = vmatpush.msra.mxu0 0.0
        %v289 = vand.u32 %v277, 4294901760
        %290 = vmatpush.msra.mxu0 %v289
        %v291 = vand.u32 %v276, 4294901760
        %292 = vmatpush.msra.mxu0 %v291
        %v293 = vand.u32 %v275, 4294901760
        %294 = vmatpush.msra.mxu0 %v293
        %v295 = vand.u32 %v274, 4294901760
        %296 = vmatpush.msra.mxu0 %v295
        %v297 = vand.u32 %v273, 4294901760
        %298 = vmatpush.msra.mxu0 %v297
        %v299 = vand.u32 %v272, 4294901760
        %300 = vmatpush.msra.mxu0 %v299
        %v301 = vand.u32 %v271, 4294901760
        %302 = vmatpush.msra.mxu0 %v301
        %v303 = vand.u32 %v270, 4294901760
        %304 = vmatpush.msra.mxu0 %v303
        %v305 = vand.u32 %v279, 4294901760
        %v306 = vsub.f32 %v279, %v305
        %v307 = vand.u32 %v306, 4294901760
        %v308 = vsub.f32 %v306, %v307
        %v309 = vand.u32 %v308, 4294901760
        %310 = vmatmul.f32.gmra.mxu0 %v309
        %v311 = vpop.f32.mrf.mxu0
        %v312 = vadd.f32 0.0, %v311
        %313 = vdwg.mxu0
        %314 = vmatpush.msra.mxu0 0.0
        %315 = vmatpush.msra.mxu0 0.0
        %316 = vmatpush.msra.mxu0 0.0
        %317 = vmatpush.msra.mxu0 0.0
        %318 = vmatpush.msra.mxu0 0.0
        %319 = vmatpush.msra.mxu0 0.0
        %320 = vmatpush.msra.mxu0 0.0
        %321 = vmatpush.msra.mxu0 0.0
        %v322 = vand.u32 %v277, 4294901760
        %v323 = vsub.f32 %v277, %v322
        %v324 = vand.u32 %v323, 4294901760
        %v325 = vsub.f32 %v323, %v324
        %v326 = vand.u32 %v325, 4294901760
        %327 = vmatpush.msra.mxu0 %v326
        %v328 = vand.u32 %v276, 4294901760
        %v329 = vsub.f32 %v276, %v328
        %v330 = vand.u32 %v329, 4294901760
        %v331 = vsub.f32 %v329, %v330
        %v332 = vand.u32 %v331, 4294901760
        %333 = vmatpush.msra.mxu0 %v332
        %v334 = vand.u32 %v275, 4294901760
        %v335 = vsub.f32 %v275, %v334
        %v336 = vand.u32 %v335, 4294901760
        %v337 = vsub.f32 %v335, %v336
        %v338 = vand.u32 %v337, 4294901760
        %339 = vmatpush.msra.mxu0 %v338
        %v340 = vand.u32 %v274, 4294901760
        %v341 = vsub.f32 %v274, %v340
        %v342 = vand.u32 %v341, 4294901760
        %v343 = vsub.f32 %v341, %v342
        %v344 = vand.u32 %v343, 4294901760
        %345 = vmatpush.msra.mxu0 %v344
        %v346 = vand.u32 %v273, 4294901760
        %v347 = vsub.f32 %v273, %v346
        %v348 = vand.u32 %v347, 4294901760
        %v349 = vsub.f32 %v347, %v348
        %v350 = vand.u32 %v349, 4294901760
        %351 = vmatpush.msra.mxu0 %v350
        %v352 = vand.u32 %v272, 4294901760
        %v353 = vsub.f32 %v272, %v352
        %v354 = vand.u32 %v353, 4294901760
        %v355 = vsub.f32 %v353, %v354
        %v356 = vand.u32 %v355, 4294901760
        %357 = vmatpush.msra.mxu0 %v356
        %v358 = vand.u32 %v271, 4294901760
        %v359 = vsub.f32 %v271, %v358
        %v360 = vand.u32 %v359, 4294901760
        %v361 = vsub.f32 %v359, %v360
        %v362 = vand.u32 %v361, 4294901760
        %363 = vmatpush.msra.mxu0 %v362
        %v364 = vand.u32 %v270, 4294901760
        %v365 = vsub.f32 %v270, %v364
        %v366 = vand.u32 %v365, 4294901760
        %v367 = vsub.f32 %v365, %v366
        %v368 = vand.u32 %v367, 4294901760
        %369 = vmatpush.msra.mxu0 %v368
        %v370 = vand.u32 %v279, 4294901760
        %371 = vmatmul.f32.gmra.mxu0 %v370
        %v372 = vpop.f32.mrf.mxu0
        %v373 = vadd.f32 %v312, %v372
        %374 = vdwg.mxu0
        %375 = vmatpush.msra.mxu0 0.0
        %376 = vmatpush.msra.mxu0 0.0
        %377 = vmatpush.msra.mxu0 0.0
        %378 = vmatpush.msra.mxu0 0.0
        %379 = vmatpush.msra.mxu0 0.0
        %380 = vmatpush.msra.mxu0 0.0
        %381 = vmatpush.msra.mxu0 0.0
        %382 = vmatpush.msra.mxu0 0.0
        %v383 = vand.u32 %v277, 4294901760
        %v384 = vsub.f32 %v277, %v383
        %385 = vmatpush.msra.mxu0 %v384
        %v386 = vand.u32 %v276, 4294901760
        %v387 = vsub.f32 %v276, %v386
        %388 = vmatpush.msra.mxu0 %v387
        %v389 = vand.u32 %v275, 4294901760
        %v390 = vsub.f32 %v275, %v389
        %391 = vmatpush.msra.mxu0 %v390
        %v392 = vand.u32 %v274, 4294901760
        %v393 = vsub.f32 %v274, %v392
        %394 = vmatpush.msra.mxu0 %v393
        %v395 = vand.u32 %v273, 4294901760
        %v396 = vsub.f32 %v273, %v395
        %397 = vmatpush.msra.mxu0 %v396
        %v398 = vand.u32 %v272, 4294901760
        %v399 = vsub.f32 %v272, %v398
        %400 = vmatpush.msra.mxu0 %v399
        %v401 = vand.u32 %v271, 4294901760
        %v402 = vsub.f32 %v271, %v401
        %403 = vmatpush.msra.mxu0 %v402
        %v404 = vand.u32 %v270, 4294901760
        %v405 = vsub.f32 %v270, %v404
        %406 = vmatpush.msra.mxu0 %v405
        %v407 = vand.u32 %v279, 4294901760
        %v408 = vsub.f32 %v279, %v407
        %409 = vmatmul.f32.gmra.mxu0 %v408
        %v410 = vpop.f32.mrf.mxu0
        %v411 = vadd.f32 %v373, %v410
        %412 = vdwg.mxu0
        %413 = vmatpush.msra.mxu0 0.0
        %414 = vmatpush.msra.mxu0 0.0
        %415 = vmatpush.msra.mxu0 0.0
        %416 = vmatpush.msra.mxu0 0.0
        %417 = vmatpush.msra.mxu0 0.0
        %418 = vmatpush.msra.mxu0 0.0
        %419 = vmatpush.msra.mxu0 0.0
        %420 = vmatpush.msra.mxu0 0.0
        %v421 = vand.u32 %v277, 4294901760
        %422 = vmatpush.msra.mxu0 %v421
        %v423 = vand.u32 %v276, 4294901760
        %424 = vmatpush.msra.mxu0 %v423
        %v425 = vand.u32 %v275, 4294901760
        %426 = vmatpush.msra.mxu0 %v425
        %v427 = vand.u32 %v274, 4294901760
        %428 = vmatpush.msra.mxu0 %v427
        %v429 = vand.u32 %v273, 4294901760
        %430 = vmatpush.msra.mxu0 %v429
        %v431 = vand.u32 %v272, 4294901760
        %432 = vmatpush.msra.mxu0 %v431
        %v433 = vand.u32 %v271, 4294901760
        %434 = vmatpush.msra.mxu0 %v433
        %v435 = vand.u32 %v270, 4294901760
        %436 = vmatpush.msra.mxu0 %v435
        %v437 = vand.u32 %v279, 4294901760
        %v438 = vsub.f32 %v279, %v437
        %v439 = vand.u32 %v438, 4294901760
        %440 = vmatmul.f32.gmra.mxu0 %v439
        %v441 = vpop.f32.mrf.mxu0
        %v442 = vadd.f32 %v411, %v441
        %443 = vdwg.mxu0
        %444 = vmatpush.msra.mxu0 0.0
        %445 = vmatpush.msra.mxu0 0.0
        %446 = vmatpush.msra.mxu0 0.0
        %447 = vmatpush.msra.mxu0 0.0
        %448 = vmatpush.msra.mxu0 0.0
        %449 = vmatpush.msra.mxu0 0.0
        %450 = vmatpush.msra.mxu0 0.0
        %451 = vmatpush.msra.mxu0 0.0
        %v452 = vand.u32 %v277, 4294901760
        %v453 = vsub.f32 %v277, %v452
        %v454 = vand.u32 %v453, 4294901760
        %455 = vmatpush.msra.mxu0 %v454
        %v456 = vand.u32 %v276, 4294901760
        %v457 = vsub.f32 %v276, %v456
        %v458 = vand.u32 %v457, 4294901760
        %459 = vmatpush.msra.mxu0 %v458
        %v460 = vand.u32 %v275, 4294901760
        %v461 = vsub.f32 %v275, %v460
        %v462 = vand.u32 %v461, 4294901760
        %463 = vmatpush.msra.mxu0 %v462
        %v464 = vand.u32 %v274, 4294901760
        %v465 = vsub.f32 %v274, %v464
        %v466 = vand.u32 %v465, 4294901760
        %467 = vmatpush.msra.mxu0 %v466
        %v468 = vand.u32 %v273, 4294901760
        %v469 = vsub.f32 %v273, %v468
        %v470 = vand.u32 %v469, 4294901760
        %471 = vmatpush.msra.mxu0 %v470
        %v472 = vand.u32 %v272, 4294901760
        %v473 = vsub.f32 %v272, %v472
        %v474 = vand.u32 %v473, 4294901760
        %475 = vmatpush.msra.mxu0 %v474
        %v476 = vand.u32 %v271, 4294901760
        %v477 = vsub.f32 %v271, %v476
        %v478 = vand.u32 %v477, 4294901760
        %479 = vmatpush.msra.mxu0 %v478
        %v480 = vand.u32 %v270, 4294901760
        %v481 = vsub.f32 %v270, %v480
        %v482 = vand.u32 %v481, 4294901760
        %483 = vmatpush.msra.mxu0 %v482
        %v484 = vand.u32 %v279, 4294901760
        %485 = vmatmul.f32.gmra.mxu0 %v484
        %v486 = vpop.f32.mrf.mxu0
        %v487 = vadd.f32 %v442, %v486
        %488 = vdwg.mxu0
        %489 = vmatpush.msra.mxu0 0.0
        %490 = vmatpush.msra.mxu0 0.0
        %491 = vmatpush.msra.mxu0 0.0
        %492 = vmatpush.msra.mxu0 0.0
        %493 = vmatpush.msra.mxu0 0.0
        %494 = vmatpush.msra.mxu0 0.0
        %495 = vmatpush.msra.mxu0 0.0
        %496 = vmatpush.msra.mxu0 0.0
        %v497 = vand.u32 %v277, 4294901760
        %498 = vmatpush.msra.mxu0 %v497
        %v499 = vand.u32 %v276, 4294901760
        %500 = vmatpush.msra.mxu0 %v499
        %v501 = vand.u32 %v275, 4294901760
        %502 = vmatpush.msra.mxu0 %v501
        %v503 = vand.u32 %v274, 4294901760
        %504 = vmatpush.msra.mxu0 %v503
        %v505 = vand.u32 %v273, 4294901760
        %506 = vmatpush.msra.mxu0 %v505
        %v507 = vand.u32 %v272, 4294901760
        %508 = vmatpush.msra.mxu0 %v507
        %v509 = vand.u32 %v271, 4294901760
        %510 = vmatpush.msra.mxu0 %v509
        %v511 = vand.u32 %v270, 4294901760
        %512 = vmatpush.msra.mxu0 %v511
        %v513 = vand.u32 %v279, 4294901760
        %514 = vmatmul.f32.gmra.mxu0 %v513
        %v515 = vpop.f32.mrf.mxu0
        %v516 = vadd.f32 %v487, %v515
        %517 = vdwg.mxu0
        %v518 = vrcp.pop %v516
        %v519 = vmul.f32 %v516, %v518
        %v520 = vsub.f32 2.0, %v519
        %v521 = vmul.f32 %v518, %v520
        %v522 = vld [vmem:[%s259] sm:$0x1]
        %v523 = vld [vmem:[%s259 + $0x8] sm:$0x1]
        %v524 = vld [vmem:[%s259 + $0x10] sm:$0x1]
        %v525 = vld [vmem:[%s259 + $0x18] sm:$0x1]
        %v526 = vperm.slane %v269, 0
        %v527 = vmul.f32 %v522, %v526
        %v528 = vmul.f32 %v523, %v526
        %v529 = vmul.f32 %v524, %v526
        %v530 = vmul.f32 %v525, %v526
        %v535 = vrot.slane %v528, 7
        %vm536 = vcmask 1041409
        %v537 = vsel %vm536, %v535, %v527
        %v538 = vrot.slane %v529, 6
        %vm539 = vcmask 1042434
        %v540 = vsel %vm539, %v538, %v537
        %v541 = vrot.slane %v530, 5
        %vm542 = vcmask 1043459
        %v543 = vsel %vm542, %v541, %v540
        %v544 = vsel %vm263, %v543, 0
        %546 = vmatpush.msra.mxu0 0.0
        %547 = vmatpush.msra.mxu0 0.0
        %548 = vmatpush.msra.mxu0 0.0
        %549 = vmatpush.msra.mxu0 0.0
        %550 = vmatpush.msra.mxu0 0.0
        %551 = vmatpush.msra.mxu0 0.0
        %552 = vmatpush.msra.mxu0 0.0
        %553 = vmatpush.msra.mxu0 0.0
        %v554 = vand.u32 %v277, 4294901760
        %555 = vmatpush.msra.mxu0 %v554
        %v556 = vand.u32 %v276, 4294901760
        %557 = vmatpush.msra.mxu0 %v556
        %v558 = vand.u32 %v275, 4294901760
        %559 = vmatpush.msra.mxu0 %v558
        %v560 = vand.u32 %v274, 4294901760
        %561 = vmatpush.msra.mxu0 %v560
        %v562 = vand.u32 %v273, 4294901760
        %563 = vmatpush.msra.mxu0 %v562
        %v564 = vand.u32 %v272, 4294901760
        %565 = vmatpush.msra.mxu0 %v564
        %v566 = vand.u32 %v271, 4294901760
        %567 = vmatpush.msra.mxu0 %v566
        %v568 = vand.u32 %v270, 4294901760
        %569 = vmatpush.msra.mxu0 %v568
        %v570 = vand.u32 %v544, 4294901760
        %v571 = vsub.f32 %v544, %v570
        %v572 = vand.u32 %v571, 4294901760
        %v573 = vsub.f32 %v571, %v572
        %v574 = vand.u32 %v573, 4294901760
        %575 = vmatmul.f32.gmra.mxu0 %v574
        %v576 = vpop.f32.mrf.mxu0
        %v577 = vadd.f32 0.0, %v576
        %578 = vdwg.mxu0
        %579 = vmatpush.msra.mxu0 0.0
        %580 = vmatpush.msra.mxu0 0.0
        %581 = vmatpush.msra.mxu0 0.0
        %582 = vmatpush.msra.mxu0 0.0
        %583 = vmatpush.msra.mxu0 0.0
        %584 = vmatpush.msra.mxu0 0.0
        %585 = vmatpush.msra.mxu0 0.0
        %586 = vmatpush.msra.mxu0 0.0
        %v587 = vand.u32 %v277, 4294901760
        %v588 = vsub.f32 %v277, %v587
        %v589 = vand.u32 %v588, 4294901760
        %v590 = vsub.f32 %v588, %v589
        %v591 = vand.u32 %v590, 4294901760
        %592 = vmatpush.msra.mxu0 %v591
        %v593 = vand.u32 %v276, 4294901760
        %v594 = vsub.f32 %v276, %v593
        %v595 = vand.u32 %v594, 4294901760
        %v596 = vsub.f32 %v594, %v595
        %v597 = vand.u32 %v596, 4294901760
        %598 = vmatpush.msra.mxu0 %v597
        %v599 = vand.u32 %v275, 4294901760
        %v600 = vsub.f32 %v275, %v599
        %v601 = vand.u32 %v600, 4294901760
        %v602 = vsub.f32 %v600, %v601
        %v603 = vand.u32 %v602, 4294901760
        %604 = vmatpush.msra.mxu0 %v603
        %v605 = vand.u32 %v274, 4294901760
        %v606 = vsub.f32 %v274, %v605
        %v607 = vand.u32 %v606, 4294901760
        %v608 = vsub.f32 %v606, %v607
        %v609 = vand.u32 %v608, 4294901760
        %610 = vmatpush.msra.mxu0 %v609
        %v611 = vand.u32 %v273, 4294901760
        %v612 = vsub.f32 %v273, %v611
        %v613 = vand.u32 %v612, 4294901760
        %v614 = vsub.f32 %v612, %v613
        %v615 = vand.u32 %v614, 4294901760
        %616 = vmatpush.msra.mxu0 %v615
        %v617 = vand.u32 %v272, 4294901760
        %v618 = vsub.f32 %v272, %v617
        %v619 = vand.u32 %v618, 4294901760
        %v620 = vsub.f32 %v618, %v619
        %v621 = vand.u32 %v620, 4294901760
        %622 = vmatpush.msra.mxu0 %v621
        %v623 = vand.u32 %v271, 4294901760
        %v624 = vsub.f32 %v271, %v623
        %v625 = vand.u32 %v624, 4294901760
        %v626 = vsub.f32 %v624, %v625
        %v627 = vand.u32 %v626, 4294901760
        %628 = vmatpush.msra.mxu0 %v627
        %v629 = vand.u32 %v270, 4294901760
        %v630 = vsub.f32 %v270, %v629
        %v631 = vand.u32 %v630, 4294901760
        %v632 = vsub.f32 %v630, %v631
        %v633 = vand.u32 %v632, 4294901760
        %634 = vmatpush.msra.mxu0 %v633
        %v635 = vand.u32 %v544, 4294901760
        %636 = vmatmul.f32.gmra.mxu0 %v635
        %v637 = vpop.f32.mrf.mxu0
        %v638 = vadd.f32 %v577, %v637
        %639 = vdwg.mxu0
        %640 = vmatpush.msra.mxu0 0.0
        %641 = vmatpush.msra.mxu0 0.0
        %642 = vmatpush.msra.mxu0 0.0
        %643 = vmatpush.msra.mxu0 0.0
        %644 = vmatpush.msra.mxu0 0.0
        %645 = vmatpush.msra.mxu0 0.0
        %646 = vmatpush.msra.mxu0 0.0
        %647 = vmatpush.msra.mxu0 0.0
        %v648 = vand.u32 %v277, 4294901760
        %v649 = vsub.f32 %v277, %v648
        %650 = vmatpush.msra.mxu0 %v649
        %v651 = vand.u32 %v276, 4294901760
        %v652 = vsub.f32 %v276, %v651
        %653 = vmatpush.msra.mxu0 %v652
        %v654 = vand.u32 %v275, 4294901760
        %v655 = vsub.f32 %v275, %v654
        %656 = vmatpush.msra.mxu0 %v655
        %v657 = vand.u32 %v274, 4294901760
        %v658 = vsub.f32 %v274, %v657
        %659 = vmatpush.msra.mxu0 %v658
        %v660 = vand.u32 %v273, 4294901760
        %v661 = vsub.f32 %v273, %v660
        %662 = vmatpush.msra.mxu0 %v661
        %v663 = vand.u32 %v272, 4294901760
        %v664 = vsub.f32 %v272, %v663
        %665 = vmatpush.msra.mxu0 %v664
        %v666 = vand.u32 %v271, 4294901760
        %v667 = vsub.f32 %v271, %v666
        %668 = vmatpush.msra.mxu0 %v667
        %v669 = vand.u32 %v270, 4294901760
        %v670 = vsub.f32 %v270, %v669
        %671 = vmatpush.msra.mxu0 %v670
        %v672 = vand.u32 %v544, 4294901760
        %v673 = vsub.f32 %v544, %v672
        %674 = vmatmul.f32.gmra.mxu0 %v673
        %v675 = vpop.f32.mrf.mxu0
        %v676 = vadd.f32 %v638, %v675
        %677 = vdwg.mxu0
        %678 = vmatpush.msra.mxu0 0.0
        %679 = vmatpush.msra.mxu0 0.0
        %680 = vmatpush.msra.mxu0 0.0
        %681 = vmatpush.msra.mxu0 0.0
        %682 = vmatpush.msra.mxu0 0.0
        %683 = vmatpush.msra.mxu0 0.0
        %684 = vmatpush.msra.mxu0 0.0
        %685 = vmatpush.msra.mxu0 0.0
        %v686 = vand.u32 %v277, 4294901760
        %687 = vmatpush.msra.mxu0 %v686
        %v688 = vand.u32 %v276, 4294901760
        %689 = vmatpush.msra.mxu0 %v688
        %v690 = vand.u32 %v275, 4294901760
        %691 = vmatpush.msra.mxu0 %v690
        %v692 = vand.u32 %v274, 4294901760
        %693 = vmatpush.msra.mxu0 %v692
        %v694 = vand.u32 %v273, 4294901760
        %695 = vmatpush.msra.mxu0 %v694
        %v696 = vand.u32 %v272, 4294901760
        %697 = vmatpush.msra.mxu0 %v696
        %v698 = vand.u32 %v271, 4294901760
        %699 = vmatpush.msra.mxu0 %v698
        %v700 = vand.u32 %v270, 4294901760
        %701 = vmatpush.msra.mxu0 %v700
        %v702 = vand.u32 %v544, 4294901760
        %v703 = vsub.f32 %v544, %v702
        %v704 = vand.u32 %v703, 4294901760
        %705 = vmatmul.f32.gmra.mxu0 %v704
        %v706 = vpop.f32.mrf.mxu0
        %v707 = vadd.f32 %v676, %v706
        %708 = vdwg.mxu0
        %709 = vmatpush.msra.mxu0 0.0
        %710 = vmatpush.msra.mxu0 0.0
        %711 = vmatpush.msra.mxu0 0.0
        %712 = vmatpush.msra.mxu0 0.0
        %713 = vmatpush.msra.mxu0 0.0
        %714 = vmatpush.msra.mxu0 0.0
        %715 = vmatpush.msra.mxu0 0.0
        %716 = vmatpush.msra.mxu0 0.0
        %v717 = vand.u32 %v277, 4294901760
        %v718 = vsub.f32 %v277, %v717
        %v719 = vand.u32 %v718, 4294901760
        %720 = vmatpush.msra.mxu0 %v719
        %v721 = vand.u32 %v276, 4294901760
        %v722 = vsub.f32 %v276, %v721
        %v723 = vand.u32 %v722, 4294901760
        %724 = vmatpush.msra.mxu0 %v723
        %v725 = vand.u32 %v275, 4294901760
        %v726 = vsub.f32 %v275, %v725
        %v727 = vand.u32 %v726, 4294901760
        %728 = vmatpush.msra.mxu0 %v727
        %v729 = vand.u32 %v274, 4294901760
        %v730 = vsub.f32 %v274, %v729
        %v731 = vand.u32 %v730, 4294901760
        %732 = vmatpush.msra.mxu0 %v731
        %v733 = vand.u32 %v273, 4294901760
        %v734 = vsub.f32 %v273, %v733
        %v735 = vand.u32 %v734, 4294901760
        %736 = vmatpush.msra.mxu0 %v735
        %v737 = vand.u32 %v272, 4294901760
        %v738 = vsub.f32 %v272, %v737
        %v739 = vand.u32 %v738, 4294901760
        %740 = vmatpush.msra.mxu0 %v739
        %v741 = vand.u32 %v271, 4294901760
        %v742 = vsub.f32 %v271, %v741
        %v743 = vand.u32 %v742, 4294901760
        %744 = vmatpush.msra.mxu0 %v743
        %v745 = vand.u32 %v270, 4294901760
        %v746 = vsub.f32 %v270, %v745
        %v747 = vand.u32 %v746, 4294901760
        %748 = vmatpush.msra.mxu0 %v747
        %v749 = vand.u32 %v544, 4294901760
        %750 = vmatmul.f32.gmra.mxu0 %v749
        %v751 = vpop.f32.mrf.mxu0
        %v752 = vadd.f32 %v707, %v751
        %753 = vdwg.mxu0
        %754 = vmatpush.msra.mxu0 0.0
        %755 = vmatpush.msra.mxu0 0.0
        %756 = vmatpush.msra.mxu0 0.0
        %757 = vmatpush.msra.mxu0 0.0
        %758 = vmatpush.msra.mxu0 0.0
        %759 = vmatpush.msra.mxu0 0.0
        %760 = vmatpush.msra.mxu0 0.0
        %761 = vmatpush.msra.mxu0 0.0
        %v762 = vand.u32 %v277, 4294901760
        %763 = vmatpush.msra.mxu0 %v762
        %v764 = vand.u32 %v276, 4294901760
        %765 = vmatpush.msra.mxu0 %v764
        %v766 = vand.u32 %v275, 4294901760
        %767 = vmatpush.msra.mxu0 %v766
        %v768 = vand.u32 %v274, 4294901760
        %769 = vmatpush.msra.mxu0 %v768
        %v770 = vand.u32 %v273, 4294901760
        %771 = vmatpush.msra.mxu0 %v770
        %v772 = vand.u32 %v272, 4294901760
        %773 = vmatpush.msra.mxu0 %v772
        %v774 = vand.u32 %v271, 4294901760
        %775 = vmatpush.msra.mxu0 %v774
        %v776 = vand.u32 %v270, 4294901760
        %777 = vmatpush.msra.mxu0 %v776
        %v778 = vand.u32 %v544, 4294901760
        %779 = vmatmul.f32.gmra.mxu0 %v778
        %v780 = vpop.f32.mrf.mxu0
        %v781 = vadd.f32 %v752, %v780
        %782 = vdwg.mxu0
        %v783 = vperm.slane %v521, 0
        %v784 = vmul.f32 %v781, %v783
        %v786 = vrot.slane %v784, 1
        %v787 = vrot.slane %v784, 2
        %v788 = vrot.slane %v784, 3
        %vm792 = vcmask 57344
        %793 = vst.msk [vmem:[%s247] sm:$0x1] %vm792, %v784
        %794 = vst.msk [vmem:[%s247 + $0x8] sm:$0x1] %vm792, %v786
        %795 = vst.msk [vmem:[%s247 + $0x10] sm:$0x1] %vm792, %v787
        %796 = vst.msk [vmem:[%s247 + $0x18] sm:$0x1] %vm792, %v788
        %v797 = vld [vmem:[%s259 + $0x1] sm:$0x1]
        %v798 = vld [vmem:[%s259 + $0x9] sm:$0x1]
        %v799 = vld [vmem:[%s259 + $0x11] sm:$0x1]
        %v800 = vld [vmem:[%s259 + $0x19] sm:$0x1]
        %v801 = vperm.slane %v269, 1
        %v802 = vmul.f32 %v797, %v801
        %v803 = vmul.f32 %v798, %v801
        %v804 = vmul.f32 %v799, %v801
        %v805 = vmul.f32 %v800, %v801
        %v810 = vrot.slane %v803, 7
        %v811 = vsel %vm536, %v810, %v802
        %v812 = vrot.slane %v804, 6
        %v813 = vsel %vm539, %v812, %v811
        %v814 = vrot.slane %v805, 5
        %v815 = vsel %vm542, %v814, %v813
        %v816 = vsel %vm263, %v815, 0
        %818 = vmatpush.msra.mxu0 0.0
        %819 = vmatpush.msra.mxu0 0.0
        %820 = vmatpush.msra.mxu0 0.0
        %821 = vmatpush.msra.mxu0 0.0
        %822 = vmatpush.msra.mxu0 0.0
        %823 = vmatpush.msra.mxu0 0.0
        %824 = vmatpush.msra.mxu0 0.0
        %825 = vmatpush.msra.mxu0 0.0
        %v826 = vand.u32 %v277, 4294901760
        %827 = vmatpush.msra.mxu0 %v826
        %v828 = vand.u32 %v276, 4294901760
        %829 = vmatpush.msra.mxu0 %v828
        %v830 = vand.u32 %v275, 4294901760
        %831 = vmatpush.msra.mxu0 %v830
        %v832 = vand.u32 %v274, 4294901760
        %833 = vmatpush.msra.mxu0 %v832
        %v834 = vand.u32 %v273, 4294901760
        %835 = vmatpush.msra.mxu0 %v834
        %v836 = vand.u32 %v272, 4294901760
        %837 = vmatpush.msra.mxu0 %v836
        %v838 = vand.u32 %v271, 4294901760
        %839 = vmatpush.msra.mxu0 %v838
        %v840 = vand.u32 %v270, 4294901760
        %841 = vmatpush.msra.mxu0 %v840
        %v842 = vand.u32 %v816, 4294901760
        %v843 = vsub.f32 %v816, %v842
        %v844 = vand.u32 %v843, 4294901760
        %v845 = vsub.f32 %v843, %v844
        %v846 = vand.u32 %v845, 4294901760
        %847 = vmatmul.f32.gmra.mxu0 %v846
        %v848 = vpop.f32.mrf.mxu0
        %v849 = vadd.f32 0.0, %v848
        %850 = vdwg.mxu0
        %851 = vmatpush.msra.mxu0 0.0
        %852 = vmatpush.msra.mxu0 0.0
        %853 = vmatpush.msra.mxu0 0.0
        %854 = vmatpush.msra.mxu0 0.0
        %855 = vmatpush.msra.mxu0 0.0
        %856 = vmatpush.msra.mxu0 0.0
        %857 = vmatpush.msra.mxu0 0.0
        %858 = vmatpush.msra.mxu0 0.0
        %v859 = vand.u32 %v277, 4294901760
        %v860 = vsub.f32 %v277, %v859
        %v861 = vand.u32 %v860, 4294901760
        %v862 = vsub.f32 %v860, %v861
        %v863 = vand.u32 %v862, 4294901760
        %864 = vmatpush.msra.mxu0 %v863
        %v865 = vand.u32 %v276, 4294901760
        %v866 = vsub.f32 %v276, %v865
        %v867 = vand.u32 %v866, 4294901760
        %v868 = vsub.f32 %v866, %v867
        %v869 = vand.u32 %v868, 4294901760
        %870 = vmatpush.msra.mxu0 %v869
        %v871 = vand.u32 %v275, 4294901760
        %v872 = vsub.f32 %v275, %v871
        %v873 = vand.u32 %v872, 4294901760
        %v874 = vsub.f32 %v872, %v873
        %v875 = vand.u32 %v874, 4294901760
        %876 = vmatpush.msra.mxu0 %v875
        %v877 = vand.u32 %v274, 4294901760
        %v878 = vsub.f32 %v274, %v877
        %v879 = vand.u32 %v878, 4294901760
        %v880 = vsub.f32 %v878, %v879
        %v881 = vand.u32 %v880, 4294901760
        %882 = vmatpush.msra.mxu0 %v881
        %v883 = vand.u32 %v273, 4294901760
        %v884 = vsub.f32 %v273, %v883
        %v885 = vand.u32 %v884, 4294901760
        %v886 = vsub.f32 %v884, %v885
        %v887 = vand.u32 %v886, 4294901760
        %888 = vmatpush.msra.mxu0 %v887
        %v889 = vand.u32 %v272, 4294901760
        %v890 = vsub.f32 %v272, %v889
        %v891 = vand.u32 %v890, 4294901760
        %v892 = vsub.f32 %v890, %v891
        %v893 = vand.u32 %v892, 4294901760
        %894 = vmatpush.msra.mxu0 %v893
        %v895 = vand.u32 %v271, 4294901760
        %v896 = vsub.f32 %v271, %v895
        %v897 = vand.u32 %v896, 4294901760
        %v898 = vsub.f32 %v896, %v897
        %v899 = vand.u32 %v898, 4294901760
        %900 = vmatpush.msra.mxu0 %v899
        %v901 = vand.u32 %v270, 4294901760
        %v902 = vsub.f32 %v270, %v901
        %v903 = vand.u32 %v902, 4294901760
        %v904 = vsub.f32 %v902, %v903
        %v905 = vand.u32 %v904, 4294901760
        %906 = vmatpush.msra.mxu0 %v905
        %v907 = vand.u32 %v816, 4294901760
        %908 = vmatmul.f32.gmra.mxu0 %v907
        %v909 = vpop.f32.mrf.mxu0
        %v910 = vadd.f32 %v849, %v909
        %911 = vdwg.mxu0
        %912 = vmatpush.msra.mxu0 0.0
        %913 = vmatpush.msra.mxu0 0.0
        %914 = vmatpush.msra.mxu0 0.0
        %915 = vmatpush.msra.mxu0 0.0
        %916 = vmatpush.msra.mxu0 0.0
        %917 = vmatpush.msra.mxu0 0.0
        %918 = vmatpush.msra.mxu0 0.0
        %919 = vmatpush.msra.mxu0 0.0
        %v920 = vand.u32 %v277, 4294901760
        %v921 = vsub.f32 %v277, %v920
        %922 = vmatpush.msra.mxu0 %v921
        %v923 = vand.u32 %v276, 4294901760
        %v924 = vsub.f32 %v276, %v923
        %925 = vmatpush.msra.mxu0 %v924
        %v926 = vand.u32 %v275, 4294901760
        %v927 = vsub.f32 %v275, %v926
        %928 = vmatpush.msra.mxu0 %v927
        %v929 = vand.u32 %v274, 4294901760
        %v930 = vsub.f32 %v274, %v929
        %931 = vmatpush.msra.mxu0 %v930
        %v932 = vand.u32 %v273, 4294901760
        %v933 = vsub.f32 %v273, %v932
        %934 = vmatpush.msra.mxu0 %v933
        %v935 = vand.u32 %v272, 4294901760
        %v936 = vsub.f32 %v272, %v935
        %937 = vmatpush.msra.mxu0 %v936
        %v938 = vand.u32 %v271, 4294901760
        %v939 = vsub.f32 %v271, %v938
        %940 = vmatpush.msra.mxu0 %v939
        %v941 = vand.u32 %v270, 4294901760
        %v942 = vsub.f32 %v270, %v941
        %943 = vmatpush.msra.mxu0 %v942
        %v944 = vand.u32 %v816, 4294901760
        %v945 = vsub.f32 %v816, %v944
        %946 = vmatmul.f32.gmra.mxu0 %v945
        %v947 = vpop.f32.mrf.mxu0
        %v948 = vadd.f32 %v910, %v947
        %949 = vdwg.mxu0
        %950 = vmatpush.msra.mxu0 0.0
        %951 = vmatpush.msra.mxu0 0.0
        %952 = vmatpush.msra.mxu0 0.0
        %953 = vmatpush.msra.mxu0 0.0
        %954 = vmatpush.msra.mxu0 0.0
        %955 = vmatpush.msra.mxu0 0.0
        %956 = vmatpush.msra.mxu0 0.0
        %957 = vmatpush.msra.mxu0 0.0
        %v958 = vand.u32 %v277, 4294901760
        %959 = vmatpush.msra.mxu0 %v958
        %v960 = vand.u32 %v276, 4294901760
        %961 = vmatpush.msra.mxu0 %v960
        %v962 = vand.u32 %v275, 4294901760
        %963 = vmatpush.msra.mxu0 %v962
        %v964 = vand.u32 %v274, 4294901760
        %965 = vmatpush.msra.mxu0 %v964
        %v966 = vand.u32 %v273, 4294901760
        %967 = vmatpush.msra.mxu0 %v966
        %v968 = vand.u32 %v272, 4294901760
        %969 = vmatpush.msra.mxu0 %v968
        %v970 = vand.u32 %v271, 4294901760
        %971 = vmatpush.msra.mxu0 %v970
        %v972 = vand.u32 %v270, 4294901760
        %973 = vmatpush.msra.mxu0 %v972
        %v974 = vand.u32 %v816, 4294901760
        %v975 = vsub.f32 %v816, %v974
        %v976 = vand.u32 %v975, 4294901760
        %977 = vmatmul.f32.gmra.mxu0 %v976
        %v978 = vpop.f32.mrf.mxu0
        %v979 = vadd.f32 %v948, %v978
        %980 = vdwg.mxu0
        %981 = vmatpush.msra.mxu0 0.0
        %982 = vmatpush.msra.mxu0 0.0
        %983 = vmatpush.msra.mxu0 0.0
        %984 = vmatpush.msra.mxu0 0.0
        %985 = vmatpush.msra.mxu0 0.0
        %986 = vmatpush.msra.mxu0 0.0
        %987 = vmatpush.msra.mxu0 0.0
        %988 = vmatpush.msra.mxu0 0.0
        %v989 = vand.u32 %v277, 4294901760
        %v990 = vsub.f32 %v277, %v989
        %v991 = vand.u32 %v990, 4294901760
        %992 = vmatpush.msra.mxu0 %v991
        %v993 = vand.u32 %v276, 4294901760
        %v994 = vsub.f32 %v276, %v993
        %v995 = vand.u32 %v994, 4294901760
        %996 = vmatpush.msra.mxu0 %v995
        %v997 = vand.u32 %v275, 4294901760
        %v998 = vsub.f32 %v275, %v997
        %v999 = vand.u32 %v998, 4294901760
        %1000 = vmatpush.msra.mxu0 %v999
        %v1001 = vand.u32 %v274, 4294901760
        %v1002 = vsub.f32 %v274, %v1001
        %v1003 = vand.u32 %v1002, 4294901760
        %1004 = vmatpush.msra.mxu0 %v1003
        %v1005 = vand.u32 %v273, 4294901760
        %v1006 = vsub.f32 %v273, %v1005
        %v1007 = vand.u32 %v1006, 4294901760
        %1008 = vmatpush.msra.mxu0 %v1007
        %v1009 = vand.u32 %v272, 4294901760
        %v1010 = vsub.f32 %v272, %v1009
        %v1011 = vand.u32 %v1010, 4294901760
        %1012 = vmatpush.msra.mxu0 %v1011
        %v1013 = vand.u32 %v271, 4294901760
        %v1014 = vsub.f32 %v271, %v1013
        %v1015 = vand.u32 %v1014, 4294901760
        %1016 = vmatpush.msra.mxu0 %v1015
        %v1017 = vand.u32 %v270, 4294901760
        %v1018 = vsub.f32 %v270, %v1017
        %v1019 = vand.u32 %v1018, 4294901760
        %1020 = vmatpush.msra.mxu0 %v1019
        %v1021 = vand.u32 %v816, 4294901760
        %1022 = vmatmul.f32.gmra.mxu0 %v1021
        %v1023 = vpop.f32.mrf.mxu0
        %v1024 = vadd.f32 %v979, %v1023
        %1025 = vdwg.mxu0
        %1026 = vmatpush.msra.mxu0 0.0
        %1027 = vmatpush.msra.mxu0 0.0
        %1028 = vmatpush.msra.mxu0 0.0
        %1029 = vmatpush.msra.mxu0 0.0
        %1030 = vmatpush.msra.mxu0 0.0
        %1031 = vmatpush.msra.mxu0 0.0
        %1032 = vmatpush.msra.mxu0 0.0
        %1033 = vmatpush.msra.mxu0 0.0
        %v1034 = vand.u32 %v277, 4294901760
        %1035 = vmatpush.msra.mxu0 %v1034
        %v1036 = vand.u32 %v276, 4294901760
        %1037 = vmatpush.msra.mxu0 %v1036
        %v1038 = vand.u32 %v275, 4294901760
        %1039 = vmatpush.msra.mxu0 %v1038
        %v1040 = vand.u32 %v274, 4294901760
        %1041 = vmatpush.msra.mxu0 %v1040
        %v1042 = vand.u32 %v273, 4294901760
        %1043 = vmatpush.msra.mxu0 %v1042
        %v1044 = vand.u32 %v272, 4294901760
        %1045 = vmatpush.msra.mxu0 %v1044
        %v1046 = vand.u32 %v271, 4294901760
        %1047 = vmatpush.msra.mxu0 %v1046
        %v1048 = vand.u32 %v270, 4294901760
        %1049 = vmatpush.msra.mxu0 %v1048
        %v1050 = vand.u32 %v816, 4294901760
        %1051 = vmatmul.f32.gmra.mxu0 %v1050
        %v1052 = vpop.f32.mrf.mxu0
        %v1053 = vadd.f32 %v1024, %v1052
        %1054 = vdwg.mxu0
        %v1055 = vperm.slane %v521, 1
        %v1056 = vmul.f32 %v1053, %v1055
        %v1058 = vrot.slane %v1056, 1
        %v1059 = vrot.slane %v1056, 2
        %v1060 = vrot.slane %v1056, 3
        %1064 = vst.msk [vmem:[%s247 + $0x1] sm:$0x1] %vm792, %v1056
        %1065 = vst.msk [vmem:[%s247 + $0x9] sm:$0x1] %vm792, %v1058
        %1066 = vst.msk [vmem:[%s247 + $0x11] sm:$0x1] %vm792, %v1059
        %1067 = vst.msk [vmem:[%s247 + $0x19] sm:$0x1] %vm792, %v1060
        %v1068 = vld [vmem:[%s259 + $0x2] sm:$0x1]
        %v1069 = vld [vmem:[%s259 + $0xa] sm:$0x1]
        %v1070 = vld [vmem:[%s259 + $0x12] sm:$0x1]
        %v1071 = vld [vmem:[%s259 + $0x1a] sm:$0x1]
        %v1072 = vperm.slane %v269, 2
        %v1073 = vmul.f32 %v1068, %v1072
        %v1074 = vmul.f32 %v1069, %v1072
        %v1075 = vmul.f32 %v1070, %v1072
        %v1076 = vmul.f32 %v1071, %v1072
        %v1081 = vrot.slane %v1074, 7
        %v1082 = vsel %vm536, %v1081, %v1073
        %v1083 = vrot.slane %v1075, 6
        %v1084 = vsel %vm539, %v1083, %v1082
        %v1085 = vrot.slane %v1076, 5
        %v1086 = vsel %vm542, %v1085, %v1084
        %v1087 = vsel %vm263, %v1086, 0
        %1089 = vmatpush.msra.mxu0 0.0
        %1090 = vmatpush.msra.mxu0 0.0
        %1091 = vmatpush.msra.mxu0 0.0
        %1092 = vmatpush.msra.mxu0 0.0
        %1093 = vmatpush.msra.mxu0 0.0
        %1094 = vmatpush.msra.mxu0 0.0
        %1095 = vmatpush.msra.mxu0 0.0
        %1096 = vmatpush.msra.mxu0 0.0
        %v1097 = vand.u32 %v277, 4294901760
        %1098 = vmatpush.msra.mxu0 %v1097
        %v1099 = vand.u32 %v276, 4294901760
        %1100 = vmatpush.msra.mxu0 %v1099
        %v1101 = vand.u32 %v275, 4294901760
        %1102 = vmatpush.msra.mxu0 %v1101
        %v1103 = vand.u32 %v274, 4294901760
        %1104 = vmatpush.msra.mxu0 %v1103
        %v1105 = vand.u32 %v273, 4294901760
        %1106 = vmatpush.msra.mxu0 %v1105
        %v1107 = vand.u32 %v272, 4294901760
        %1108 = vmatpush.msra.mxu0 %v1107
        %v1109 = vand.u32 %v271, 4294901760
        %1110 = vmatpush.msra.mxu0 %v1109
        %v1111 = vand.u32 %v270, 4294901760
        %1112 = vmatpush.msra.mxu0 %v1111
        %v1113 = vand.u32 %v1087, 4294901760
        %v1114 = vsub.f32 %v1087, %v1113
        %v1115 = vand.u32 %v1114, 4294901760
        %v1116 = vsub.f32 %v1114, %v1115
        %v1117 = vand.u32 %v1116, 4294901760
        %1118 = vmatmul.f32.gmra.mxu0 %v1117
        %v1119 = vpop.f32.mrf.mxu0
        %v1120 = vadd.f32 0.0, %v1119
        %1121 = vdwg.mxu0
        %1122 = vmatpush.msra.mxu0 0.0
        %1123 = vmatpush.msra.mxu0 0.0
        %1124 = vmatpush.msra.mxu0 0.0
        %1125 = vmatpush.msra.mxu0 0.0
        %1126 = vmatpush.msra.mxu0 0.0
        %1127 = vmatpush.msra.mxu0 0.0
        %1128 = vmatpush.msra.mxu0 0.0
        %1129 = vmatpush.msra.mxu0 0.0
        %v1130 = vand.u32 %v277, 4294901760
        %v1131 = vsub.f32 %v277, %v1130
        %v1132 = vand.u32 %v1131, 4294901760
        %v1133 = vsub.f32 %v1131, %v1132
        %v1134 = vand.u32 %v1133, 4294901760
        %1135 = vmatpush.msra.mxu0 %v1134
        %v1136 = vand.u32 %v276, 4294901760
        %v1137 = vsub.f32 %v276, %v1136
        %v1138 = vand.u32 %v1137, 4294901760
        %v1139 = vsub.f32 %v1137, %v1138
        %v1140 = vand.u32 %v1139, 4294901760
        %1141 = vmatpush.msra.mxu0 %v1140
        %v1142 = vand.u32 %v275, 4294901760
        %v1143 = vsub.f32 %v275, %v1142
        %v1144 = vand.u32 %v1143, 4294901760
        %v1145 = vsub.f32 %v1143, %v1144
        %v1146 = vand.u32 %v1145, 4294901760
        %1147 = vmatpush.msra.mxu0 %v1146
        %v1148 = vand.u32 %v274, 4294901760
        %v1149 = vsub.f32 %v274, %v1148
        %v1150 = vand.u32 %v1149, 4294901760
        %v1151 = vsub.f32 %v1149, %v1150
        %v1152 = vand.u32 %v1151, 4294901760
        %1153 = vmatpush.msra.mxu0 %v1152
        %v1154 = vand.u32 %v273, 4294901760
        %v1155 = vsub.f32 %v273, %v1154
        %v1156 = vand.u32 %v1155, 4294901760
        %v1157 = vsub.f32 %v1155, %v1156
        %v1158 = vand.u32 %v1157, 4294901760
        %1159 = vmatpush.msra.mxu0 %v1158
        %v1160 = vand.u32 %v272, 4294901760
        %v1161 = vsub.f32 %v272, %v1160
        %v1162 = vand.u32 %v1161, 4294901760
        %v1163 = vsub.f32 %v1161, %v1162
        %v1164 = vand.u32 %v1163, 4294901760
        %1165 = vmatpush.msra.mxu0 %v1164
        %v1166 = vand.u32 %v271, 4294901760
        %v1167 = vsub.f32 %v271, %v1166
        %v1168 = vand.u32 %v1167, 4294901760
        %v1169 = vsub.f32 %v1167, %v1168
        %v1170 = vand.u32 %v1169, 4294901760
        %1171 = vmatpush.msra.mxu0 %v1170
        %v1172 = vand.u32 %v270, 4294901760
        %v1173 = vsub.f32 %v270, %v1172
        %v1174 = vand.u32 %v1173, 4294901760
        %v1175 = vsub.f32 %v1173, %v1174
        %v1176 = vand.u32 %v1175, 4294901760
        %1177 = vmatpush.msra.mxu0 %v1176
        %v1178 = vand.u32 %v1087, 4294901760
        %1179 = vmatmul.f32.gmra.mxu0 %v1178
        %v1180 = vpop.f32.mrf.mxu0
        %v1181 = vadd.f32 %v1120, %v1180
        %1182 = vdwg.mxu0
        %1183 = vmatpush.msra.mxu0 0.0
        %1184 = vmatpush.msra.mxu0 0.0
        %1185 = vmatpush.msra.mxu0 0.0
        %1186 = vmatpush.msra.mxu0 0.0
        %1187 = vmatpush.msra.mxu0 0.0
        %1188 = vmatpush.msra.mxu0 0.0
        %1189 = vmatpush.msra.mxu0 0.0
        %1190 = vmatpush.msra.mxu0 0.0
        %v1191 = vand.u32 %v277, 4294901760
        %v1192 = vsub.f32 %v277, %v1191
        %1193 = vmatpush.msra.mxu0 %v1192
        %v1194 = vand.u32 %v276, 4294901760
        %v1195 = vsub.f32 %v276, %v1194
        %1196 = vmatpush.msra.mxu0 %v1195
        %v1197 = vand.u32 %v275, 4294901760
        %v1198 = vsub.f32 %v275, %v1197
        %1199 = vmatpush.msra.mxu0 %v1198
        %v1200 = vand.u32 %v274, 4294901760
        %v1201 = vsub.f32 %v274, %v1200
        %1202 = vmatpush.msra.mxu0 %v1201
        %v1203 = vand.u32 %v273, 4294901760
        %v1204 = vsub.f32 %v273, %v1203
        %1205 = vmatpush.msra.mxu0 %v1204
        %v1206 = vand.u32 %v272, 4294901760
        %v1207 = vsub.f32 %v272, %v1206
        %1208 = vmatpush.msra.mxu0 %v1207
        %v1209 = vand.u32 %v271, 4294901760
        %v1210 = vsub.f32 %v271, %v1209
        %1211 = vmatpush.msra.mxu0 %v1210
        %v1212 = vand.u32 %v270, 4294901760
        %v1213 = vsub.f32 %v270, %v1212
        %1214 = vmatpush.msra.mxu0 %v1213
        %v1215 = vand.u32 %v1087, 4294901760
        %v1216 = vsub.f32 %v1087, %v1215
        %1217 = vmatmul.f32.gmra.mxu0 %v1216
        %v1218 = vpop.f32.mrf.mxu0
        %v1219 = vadd.f32 %v1181, %v1218
        %1220 = vdwg.mxu0
        %1221 = vmatpush.msra.mxu0 0.0
        %1222 = vmatpush.msra.mxu0 0.0
        %1223 = vmatpush.msra.mxu0 0.0
        %1224 = vmatpush.msra.mxu0 0.0
        %1225 = vmatpush.msra.mxu0 0.0
        %1226 = vmatpush.msra.mxu0 0.0
        %1227 = vmatpush.msra.mxu0 0.0
        %1228 = vmatpush.msra.mxu0 0.0
        %v1229 = vand.u32 %v277, 4294901760
        %1230 = vmatpush.msra.mxu0 %v1229
        %v1231 = vand.u32 %v276, 4294901760
        %1232 = vmatpush.msra.mxu0 %v1231
        %v1233 = vand.u32 %v275, 4294901760
        %1234 = vmatpush.msra.mxu0 %v1233
        %v1235 = vand.u32 %v274, 4294901760
        %1236 = vmatpush.msra.mxu0 %v1235
        %v1237 = vand.u32 %v273, 4294901760
        %1238 = vmatpush.msra.mxu0 %v1237
        %v1239 = vand.u32 %v272, 4294901760
        %1240 = vmatpush.msra.mxu0 %v1239
        %v1241 = vand.u32 %v271, 4294901760
        %1242 = vmatpush.msra.mxu0 %v1241
        %v1243 = vand.u32 %v270, 4294901760
        %1244 = vmatpush.msra.mxu0 %v1243
        %v1245 = vand.u32 %v1087, 4294901760
        %v1246 = vsub.f32 %v1087, %v1245
        %v1247 = vand.u32 %v1246, 4294901760
        %1248 = vmatmul.f32.gmra.mxu0 %v1247
        %v1249 = vpop.f32.mrf.mxu0
        %v1250 = vadd.f32 %v1219, %v1249
        %1251 = vdwg.mxu0
        %1252 = vmatpush.msra.mxu0 0.0
        %1253 = vmatpush.msra.mxu0 0.0
        %1254 = vmatpush.msra.mxu0 0.0
        %1255 = vmatpush.msra.mxu0 0.0
        %1256 = vmatpush.msra.mxu0 0.0
        %1257 = vmatpush.msra.mxu0 0.0
        %1258 = vmatpush.msra.mxu0 0.0
        %1259 = vmatpush.msra.mxu0 0.0
        %v1260 = vand.u32 %v277, 4294901760
        %v1261 = vsub.f32 %v277, %v1260
        %v1262 = vand.u32 %v1261, 4294901760
        %1263 = vmatpush.msra.mxu0 %v1262
        %v1264 = vand.u32 %v276, 4294901760
        %v1265 = vsub.f32 %v276, %v1264
        %v1266 = vand.u32 %v1265, 4294901760
        %1267 = vmatpush.msra.mxu0 %v1266
        %v1268 = vand.u32 %v275, 4294901760
        %v1269 = vsub.f32 %v275, %v1268
        %v1270 = vand.u32 %v1269, 4294901760
        %1271 = vmatpush.msra.mxu0 %v1270
        %v1272 = vand.u32 %v274, 4294901760
        %v1273 = vsub.f32 %v274, %v1272
        %v1274 = vand.u32 %v1273, 4294901760
        %1275 = vmatpush.msra.mxu0 %v1274
        %v1276 = vand.u32 %v273, 4294901760
        %v1277 = vsub.f32 %v273, %v1276
        %v1278 = vand.u32 %v1277, 4294901760
        %1279 = vmatpush.msra.mxu0 %v1278
        %v1280 = vand.u32 %v272, 4294901760
        %v1281 = vsub.f32 %v272, %v1280
        %v1282 = vand.u32 %v1281, 4294901760
        %1283 = vmatpush.msra.mxu0 %v1282
        %v1284 = vand.u32 %v271, 4294901760
        %v1285 = vsub.f32 %v271, %v1284
        %v1286 = vand.u32 %v1285, 4294901760
        %1287 = vmatpush.msra.mxu0 %v1286
        %v1288 = vand.u32 %v270, 4294901760
        %v1289 = vsub.f32 %v270, %v1288
        %v1290 = vand.u32 %v1289, 4294901760
        %1291 = vmatpush.msra.mxu0 %v1290
        %v1292 = vand.u32 %v1087, 4294901760
        %1293 = vmatmul.f32.gmra.mxu0 %v1292
        %v1294 = vpop.f32.mrf.mxu0
        %v1295 = vadd.f32 %v1250, %v1294
        %1296 = vdwg.mxu0
        %1297 = vmatpush.msra.mxu0 0.0
        %1298 = vmatpush.msra.mxu0 0.0
        %1299 = vmatpush.msra.mxu0 0.0
        %1300 = vmatpush.msra.mxu0 0.0
        %1301 = vmatpush.msra.mxu0 0.0
        %1302 = vmatpush.msra.mxu0 0.0
        %1303 = vmatpush.msra.mxu0 0.0
        %1304 = vmatpush.msra.mxu0 0.0
        %v1305 = vand.u32 %v277, 4294901760
        %1306 = vmatpush.msra.mxu0 %v1305
        %v1307 = vand.u32 %v276, 4294901760
        %1308 = vmatpush.msra.mxu0 %v1307
        %v1309 = vand.u32 %v275, 4294901760
        %1310 = vmatpush.msra.mxu0 %v1309
        %v1311 = vand.u32 %v274, 4294901760
        %1312 = vmatpush.msra.mxu0 %v1311
        %v1313 = vand.u32 %v273, 4294901760
        %1314 = vmatpush.msra.mxu0 %v1313
        %v1315 = vand.u32 %v272, 4294901760
        %1316 = vmatpush.msra.mxu0 %v1315
        %v1317 = vand.u32 %v271, 4294901760
        %1318 = vmatpush.msra.mxu0 %v1317
        %v1319 = vand.u32 %v270, 4294901760
        %1320 = vmatpush.msra.mxu0 %v1319
        %v1321 = vand.u32 %v1087, 4294901760
        %1322 = vmatmul.f32.gmra.mxu0 %v1321
        %v1323 = vpop.f32.mrf.mxu0
        %v1324 = vadd.f32 %v1295, %v1323
        %1325 = vdwg.mxu0
        %v1326 = vperm.slane %v521, 2
        %v1327 = vmul.f32 %v1324, %v1326
        %v1329 = vrot.slane %v1327, 1
        %v1330 = vrot.slane %v1327, 2
        %v1331 = vrot.slane %v1327, 3
        %1335 = vst.msk [vmem:[%s247 + $0x2] sm:$0x1] %vm792, %v1327
        %1336 = vst.msk [vmem:[%s247 + $0xa] sm:$0x1] %vm792, %v1329
        %1337 = vst.msk [vmem:[%s247 + $0x12] sm:$0x1] %vm792, %v1330
        %1338 = vst.msk [vmem:[%s247 + $0x1a] sm:$0x1] %vm792, %v1331
        %v1339 = vld [vmem:[%s259 + $0x3] sm:$0x1]
        %v1340 = vld [vmem:[%s259 + $0xb] sm:$0x1]
        %v1341 = vld [vmem:[%s259 + $0x13] sm:$0x1]
        %v1342 = vld [vmem:[%s259 + $0x1b] sm:$0x1]
        %v1343 = vperm.slane %v269, 3
        %v1344 = vmul.f32 %v1339, %v1343
        %v1345 = vmul.f32 %v1340, %v1343
        %v1346 = vmul.f32 %v1341, %v1343
        %v1347 = vmul.f32 %v1342, %v1343
        %v1352 = vrot.slane %v1345, 7
        %v1353 = vsel %vm536, %v1352, %v1344
        %v1354 = vrot.slane %v1346, 6
        %v1355 = vsel %vm539, %v1354, %v1353
        %v1356 = vrot.slane %v1347, 5
        %v1357 = vsel %vm542, %v1356, %v1355
        %v1358 = vsel %vm263, %v1357, 0
        %1360 = vmatpush.msra.mxu0 0.0
        %1361 = vmatpush.msra.mxu0 0.0
        %1362 = vmatpush.msra.mxu0 0.0
        %1363 = vmatpush.msra.mxu0 0.0
        %1364 = vmatpush.msra.mxu0 0.0
        %1365 = vmatpush.msra.mxu0 0.0
        %1366 = vmatpush.msra.mxu0 0.0
        %1367 = vmatpush.msra.mxu0 0.0
        %v1368 = vand.u32 %v277, 4294901760
        %1369 = vmatpush.msra.mxu0 %v1368
        %v1370 = vand.u32 %v276, 4294901760
        %1371 = vmatpush.msra.mxu0 %v1370
        %v1372 = vand.u32 %v275, 4294901760
        %1373 = vmatpush.msra.mxu0 %v1372
        %v1374 = vand.u32 %v274, 4294901760
        %1375 = vmatpush.msra.mxu0 %v1374
        %v1376 = vand.u32 %v273, 4294901760
        %1377 = vmatpush.msra.mxu0 %v1376
        %v1378 = vand.u32 %v272, 4294901760
        %1379 = vmatpush.msra.mxu0 %v1378
        %v1380 = vand.u32 %v271, 4294901760
        %1381 = vmatpush.msra.mxu0 %v1380
        %v1382 = vand.u32 %v270, 4294901760
        %1383 = vmatpush.msra.mxu0 %v1382
        %v1384 = vand.u32 %v1358, 4294901760
        %v1385 = vsub.f32 %v1358, %v1384
        %v1386 = vand.u32 %v1385, 4294901760
        %v1387 = vsub.f32 %v1385, %v1386
        %v1388 = vand.u32 %v1387, 4294901760
        %1389 = vmatmul.f32.gmra.mxu0 %v1388
        %v1390 = vpop.f32.mrf.mxu0
        %v1391 = vadd.f32 0.0, %v1390
        %1392 = vdwg.mxu0
        %1393 = vmatpush.msra.mxu0 0.0
        %1394 = vmatpush.msra.mxu0 0.0
        %1395 = vmatpush.msra.mxu0 0.0
        %1396 = vmatpush.msra.mxu0 0.0
        %1397 = vmatpush.msra.mxu0 0.0
        %1398 = vmatpush.msra.mxu0 0.0
        %1399 = vmatpush.msra.mxu0 0.0
        %1400 = vmatpush.msra.mxu0 0.0
        %v1401 = vand.u32 %v277, 4294901760
        %v1402 = vsub.f32 %v277, %v1401
        %v1403 = vand.u32 %v1402, 4294901760
        %v1404 = vsub.f32 %v1402, %v1403
        %v1405 = vand.u32 %v1404, 4294901760
        %1406 = vmatpush.msra.mxu0 %v1405
        %v1407 = vand.u32 %v276, 4294901760
        %v1408 = vsub.f32 %v276, %v1407
        %v1409 = vand.u32 %v1408, 4294901760
        %v1410 = vsub.f32 %v1408, %v1409
        %v1411 = vand.u32 %v1410, 4294901760
        %1412 = vmatpush.msra.mxu0 %v1411
        %v1413 = vand.u32 %v275, 4294901760
        %v1414 = vsub.f32 %v275, %v1413
        %v1415 = vand.u32 %v1414, 4294901760
        %v1416 = vsub.f32 %v1414, %v1415
        %v1417 = vand.u32 %v1416, 4294901760
        %1418 = vmatpush.msra.mxu0 %v1417
        %v1419 = vand.u32 %v274, 4294901760
        %v1420 = vsub.f32 %v274, %v1419
        %v1421 = vand.u32 %v1420, 4294901760
        %v1422 = vsub.f32 %v1420, %v1421
        %v1423 = vand.u32 %v1422, 4294901760
        %1424 = vmatpush.msra.mxu0 %v1423
        %v1425 = vand.u32 %v273, 4294901760
        %v1426 = vsub.f32 %v273, %v1425
        %v1427 = vand.u32 %v1426, 4294901760
        %v1428 = vsub.f32 %v1426, %v1427
        %v1429 = vand.u32 %v1428, 4294901760
        %1430 = vmatpush.msra.mxu0 %v1429
        %v1431 = vand.u32 %v272, 4294901760
        %v1432 = vsub.f32 %v272, %v1431
        %v1433 = vand.u32 %v1432, 4294901760
        %v1434 = vsub.f32 %v1432, %v1433
        %v1435 = vand.u32 %v1434, 4294901760
        %1436 = vmatpush.msra.mxu0 %v1435
        %v1437 = vand.u32 %v271, 4294901760
        %v1438 = vsub.f32 %v271, %v1437
        %v1439 = vand.u32 %v1438, 4294901760
        %v1440 = vsub.f32 %v1438, %v1439
        %v1441 = vand.u32 %v1440, 4294901760
        %1442 = vmatpush.msra.mxu0 %v1441
        %v1443 = vand.u32 %v270, 4294901760
        %v1444 = vsub.f32 %v270, %v1443
        %v1445 = vand.u32 %v1444, 4294901760
        %v1446 = vsub.f32 %v1444, %v1445
        %v1447 = vand.u32 %v1446, 4294901760
        %1448 = vmatpush.msra.mxu0 %v1447
        %v1449 = vand.u32 %v1358, 4294901760
        %1450 = vmatmul.f32.gmra.mxu0 %v1449
        %v1451 = vpop.f32.mrf.mxu0
        %v1452 = vadd.f32 %v1391, %v1451
        %1453 = vdwg.mxu0
        %1454 = vmatpush.msra.mxu0 0.0
        %1455 = vmatpush.msra.mxu0 0.0
        %1456 = vmatpush.msra.mxu0 0.0
        %1457 = vmatpush.msra.mxu0 0.0
        %1458 = vmatpush.msra.mxu0 0.0
        %1459 = vmatpush.msra.mxu0 0.0
        %1460 = vmatpush.msra.mxu0 0.0
        %1461 = vmatpush.msra.mxu0 0.0
        %v1462 = vand.u32 %v277, 4294901760
        %v1463 = vsub.f32 %v277, %v1462
        %1464 = vmatpush.msra.mxu0 %v1463
        %v1465 = vand.u32 %v276, 4294901760
        %v1466 = vsub.f32 %v276, %v1465
        %1467 = vmatpush.msra.mxu0 %v1466
        %v1468 = vand.u32 %v275, 4294901760
        %v1469 = vsub.f32 %v275, %v1468
        %1470 = vmatpush.msra.mxu0 %v1469
        %v1471 = vand.u32 %v274, 4294901760
        %v1472 = vsub.f32 %v274, %v1471
        %1473 = vmatpush.msra.mxu0 %v1472
        %v1474 = vand.u32 %v273, 4294901760
        %v1475 = vsub.f32 %v273, %v1474
        %1476 = vmatpush.msra.mxu0 %v1475
        %v1477 = vand.u32 %v272, 4294901760
        %v1478 = vsub.f32 %v272, %v1477
        %1479 = vmatpush.msra.mxu0 %v1478
        %v1480 = vand.u32 %v271, 4294901760
        %v1481 = vsub.f32 %v271, %v1480
        %1482 = vmatpush.msra.mxu0 %v1481
        %v1483 = vand.u32 %v270, 4294901760
        %v1484 = vsub.f32 %v270, %v1483
        %1485 = vmatpush.msra.mxu0 %v1484
        %v1486 = vand.u32 %v1358, 4294901760
        %v1487 = vsub.f32 %v1358, %v1486
        %1488 = vmatmul.f32.gmra.mxu0 %v1487
        %v1489 = vpop.f32.mrf.mxu0
        %v1490 = vadd.f32 %v1452, %v1489
        %1491 = vdwg.mxu0
        %1492 = vmatpush.msra.mxu0 0.0
        %1493 = vmatpush.msra.mxu0 0.0
        %1494 = vmatpush.msra.mxu0 0.0
        %1495 = vmatpush.msra.mxu0 0.0
        %1496 = vmatpush.msra.mxu0 0.0
        %1497 = vmatpush.msra.mxu0 0.0
        %1498 = vmatpush.msra.mxu0 0.0
        %1499 = vmatpush.msra.mxu0 0.0
        %v1500 = vand.u32 %v277, 4294901760
        %1501 = vmatpush.msra.mxu0 %v1500
        %v1502 = vand.u32 %v276, 4294901760
        %1503 = vmatpush.msra.mxu0 %v1502
        %v1504 = vand.u32 %v275, 4294901760
        %1505 = vmatpush.msra.mxu0 %v1504
        %v1506 = vand.u32 %v274, 4294901760
        %1507 = vmatpush.msra.mxu0 %v1506
        %v1508 = vand.u32 %v273, 4294901760
        %1509 = vmatpush.msra.mxu0 %v1508
        %v1510 = vand.u32 %v272, 4294901760
        %1511 = vmatpush.msra.mxu0 %v1510
        %v1512 = vand.u32 %v271, 4294901760
        %1513 = vmatpush.msra.mxu0 %v1512
        %v1514 = vand.u32 %v270, 4294901760
        %1515 = vmatpush.msra.mxu0 %v1514
        %v1516 = vand.u32 %v1358, 4294901760
        %v1517 = vsub.f32 %v1358, %v1516
        %v1518 = vand.u32 %v1517, 4294901760
        %1519 = vmatmul.f32.gmra.mxu0 %v1518
        %v1520 = vpop.f32.mrf.mxu0
        %v1521 = vadd.f32 %v1490, %v1520
        %1522 = vdwg.mxu0
        %1523 = vmatpush.msra.mxu0 0.0
        %1524 = vmatpush.msra.mxu0 0.0
        %1525 = vmatpush.msra.mxu0 0.0
        %1526 = vmatpush.msra.mxu0 0.0
        %1527 = vmatpush.msra.mxu0 0.0
        %1528 = vmatpush.msra.mxu0 0.0
        %1529 = vmatpush.msra.mxu0 0.0
        %1530 = vmatpush.msra.mxu0 0.0
        %v1531 = vand.u32 %v277, 4294901760
        %v1532 = vsub.f32 %v277, %v1531
        %v1533 = vand.u32 %v1532, 4294901760
        %1534 = vmatpush.msra.mxu0 %v1533
        %v1535 = vand.u32 %v276, 4294901760
        %v1536 = vsub.f32 %v276, %v1535
        %v1537 = vand.u32 %v1536, 4294901760
        %1538 = vmatpush.msra.mxu0 %v1537
        %v1539 = vand.u32 %v275, 4294901760
        %v1540 = vsub.f32 %v275, %v1539
        %v1541 = vand.u32 %v1540, 4294901760
        %1542 = vmatpush.msra.mxu0 %v1541
        %v1543 = vand.u32 %v274, 4294901760
        %v1544 = vsub.f32 %v274, %v1543
        %v1545 = vand.u32 %v1544, 4294901760
        %1546 = vmatpush.msra.mxu0 %v1545
        %v1547 = vand.u32 %v273, 4294901760
        %v1548 = vsub.f32 %v273, %v1547
        %v1549 = vand.u32 %v1548, 4294901760
        %1550 = vmatpush.msra.mxu0 %v1549
        %v1551 = vand.u32 %v272, 4294901760
        %v1552 = vsub.f32 %v272, %v1551
        %v1553 = vand.u32 %v1552, 4294901760
        %1554 = vmatpush.msra.mxu0 %v1553
        %v1555 = vand.u32 %v271, 4294901760
        %v1556 = vsub.f32 %v271, %v1555
        %v1557 = vand.u32 %v1556, 4294901760
        %1558 = vmatpush.msra.mxu0 %v1557
        %v1559 = vand.u32 %v270, 4294901760
        %v1560 = vsub.f32 %v270, %v1559
        %v1561 = vand.u32 %v1560, 4294901760
        %1562 = vmatpush.msra.mxu0 %v1561
        %v1563 = vand.u32 %v1358, 4294901760
        %1564 = vmatmul.f32.gmra.mxu0 %v1563
        %v1565 = vpop.f32.mrf.mxu0
        %v1566 = vadd.f32 %v1521, %v1565
        %1567 = vdwg.mxu0
        %1568 = vmatpush.msra.mxu0 0.0
        %1569 = vmatpush.msra.mxu0 0.0
        %1570 = vmatpush.msra.mxu0 0.0
        %1571 = vmatpush.msra.mxu0 0.0
        %1572 = vmatpush.msra.mxu0 0.0
        %1573 = vmatpush.msra.mxu0 0.0
        %1574 = vmatpush.msra.mxu0 0.0
        %1575 = vmatpush.msra.mxu0 0.0
        %v1576 = vand.u32 %v277, 4294901760
        %1577 = vmatpush.msra.mxu0 %v1576
        %v1578 = vand.u32 %v276, 4294901760
        %1579 = vmatpush.msra.mxu0 %v1578
        %v1580 = vand.u32 %v275, 4294901760
        %1581 = vmatpush.msra.mxu0 %v1580
        %v1582 = vand.u32 %v274, 4294901760
        %1583 = vmatpush.msra.mxu0 %v1582
        %v1584 = vand.u32 %v273, 4294901760
        %1585 = vmatpush.msra.mxu0 %v1584
        %v1586 = vand.u32 %v272, 4294901760
        %1587 = vmatpush.msra.mxu0 %v1586
        %v1588 = vand.u32 %v271, 4294901760
        %1589 = vmatpush.msra.mxu0 %v1588
        %v1590 = vand.u32 %v270, 4294901760
        %1591 = vmatpush.msra.mxu0 %v1590
        %v1592 = vand.u32 %v1358, 4294901760
        %1593 = vmatmul.f32.gmra.mxu0 %v1592
        %v1594 = vpop.f32.mrf.mxu0
        %v1595 = vadd.f32 %v1566, %v1594
        %1596 = vdwg.mxu0
        %v1597 = vperm.slane %v521, 3
        %v1598 = vmul.f32 %v1595, %v1597
        %v1600 = vrot.slane %v1598, 1
        %v1601 = vrot.slane %v1598, 2
        %v1602 = vrot.slane %v1598, 3
        %1606 = vst.msk [vmem:[%s247 + $0x3] sm:$0x1] %vm792, %v1598
        %1607 = vst.msk [vmem:[%s247 + $0xb] sm:$0x1] %vm792, %v1600
        %1608 = vst.msk [vmem:[%s247 + $0x13] sm:$0x1] %vm792, %v1601
        %1609 = vst.msk [vmem:[%s247 + $0x1b] sm:$0x1] %vm792, %v1602
        %v1610 = vld [vmem:[%s259 + $0x4] sm:$0x1]
        %v1611 = vld [vmem:[%s259 + $0xc] sm:$0x1]
        %v1612 = vld [vmem:[%s259 + $0x14] sm:$0x1]
        %v1613 = vld [vmem:[%s259 + $0x1c] sm:$0x1]
        %v1614 = vperm.slane %v269, 4
        %v1615 = vmul.f32 %v1610, %v1614
        %v1616 = vmul.f32 %v1611, %v1614
        %v1617 = vmul.f32 %v1612, %v1614
        %v1618 = vmul.f32 %v1613, %v1614
        %v1623 = vrot.slane %v1616, 7
        %v1624 = vsel %vm536, %v1623, %v1615
        %v1625 = vrot.slane %v1617, 6
        %v1626 = vsel %vm539, %v1625, %v1624
        %v1627 = vrot.slane %v1618, 5
        %v1628 = vsel %vm542, %v1627, %v1626
        %v1629 = vsel %vm263, %v1628, 0
        %1631 = vmatpush.msra.mxu0 0.0
        %1632 = vmatpush.msra.mxu0 0.0
        %1633 = vmatpush.msra.mxu0 0.0
        %1634 = vmatpush.msra.mxu0 0.0
        %1635 = vmatpush.msra.mxu0 0.0
        %1636 = vmatpush.msra.mxu0 0.0
        %1637 = vmatpush.msra.mxu0 0.0
        %1638 = vmatpush.msra.mxu0 0.0
        %v1639 = vand.u32 %v277, 4294901760
        %1640 = vmatpush.msra.mxu0 %v1639
        %v1641 = vand.u32 %v276, 4294901760
        %1642 = vmatpush.msra.mxu0 %v1641
        %v1643 = vand.u32 %v275, 4294901760
        %1644 = vmatpush.msra.mxu0 %v1643
        %v1645 = vand.u32 %v274, 4294901760
        %1646 = vmatpush.msra.mxu0 %v1645
        %v1647 = vand.u32 %v273, 4294901760
        %1648 = vmatpush.msra.mxu0 %v1647
        %v1649 = vand.u32 %v272, 4294901760
        %1650 = vmatpush.msra.mxu0 %v1649
        %v1651 = vand.u32 %v271, 4294901760
        %1652 = vmatpush.msra.mxu0 %v1651
        %v1653 = vand.u32 %v270, 4294901760
        %1654 = vmatpush.msra.mxu0 %v1653
        %v1655 = vand.u32 %v1629, 4294901760
        %v1656 = vsub.f32 %v1629, %v1655
        %v1657 = vand.u32 %v1656, 4294901760
        %v1658 = vsub.f32 %v1656, %v1657
        %v1659 = vand.u32 %v1658, 4294901760
        %1660 = vmatmul.f32.gmra.mxu0 %v1659
        %v1661 = vpop.f32.mrf.mxu0
        %v1662 = vadd.f32 0.0, %v1661
        %1663 = vdwg.mxu0
        %1664 = vmatpush.msra.mxu0 0.0
        %1665 = vmatpush.msra.mxu0 0.0
        %1666 = vmatpush.msra.mxu0 0.0
        %1667 = vmatpush.msra.mxu0 0.0
        %1668 = vmatpush.msra.mxu0 0.0
        %1669 = vmatpush.msra.mxu0 0.0
        %1670 = vmatpush.msra.mxu0 0.0
        %1671 = vmatpush.msra.mxu0 0.0
        %v1672 = vand.u32 %v277, 4294901760
        %v1673 = vsub.f32 %v277, %v1672
        %v1674 = vand.u32 %v1673, 4294901760
        %v1675 = vsub.f32 %v1673, %v1674
        %v1676 = vand.u32 %v1675, 4294901760
        %1677 = vmatpush.msra.mxu0 %v1676
        %v1678 = vand.u32 %v276, 4294901760
        %v1679 = vsub.f32 %v276, %v1678
        %v1680 = vand.u32 %v1679, 4294901760
        %v1681 = vsub.f32 %v1679, %v1680
        %v1682 = vand.u32 %v1681, 4294901760
        %1683 = vmatpush.msra.mxu0 %v1682
        %v1684 = vand.u32 %v275, 4294901760
        %v1685 = vsub.f32 %v275, %v1684
        %v1686 = vand.u32 %v1685, 4294901760
        %v1687 = vsub.f32 %v1685, %v1686
        %v1688 = vand.u32 %v1687, 4294901760
        %1689 = vmatpush.msra.mxu0 %v1688
        %v1690 = vand.u32 %v274, 4294901760
        %v1691 = vsub.f32 %v274, %v1690
        %v1692 = vand.u32 %v1691, 4294901760
        %v1693 = vsub.f32 %v1691, %v1692
        %v1694 = vand.u32 %v1693, 4294901760
        %1695 = vmatpush.msra.mxu0 %v1694
        %v1696 = vand.u32 %v273, 4294901760
        %v1697 = vsub.f32 %v273, %v1696
        %v1698 = vand.u32 %v1697, 4294901760
        %v1699 = vsub.f32 %v1697, %v1698
        %v1700 = vand.u32 %v1699, 4294901760
        %1701 = vmatpush.msra.mxu0 %v1700
        %v1702 = vand.u32 %v272, 4294901760
        %v1703 = vsub.f32 %v272, %v1702
        %v1704 = vand.u32 %v1703, 4294901760
        %v1705 = vsub.f32 %v1703, %v1704
        %v1706 = vand.u32 %v1705, 4294901760
        %1707 = vmatpush.msra.mxu0 %v1706
        %v1708 = vand.u32 %v271, 4294901760
        %v1709 = vsub.f32 %v271, %v1708
        %v1710 = vand.u32 %v1709, 4294901760
        %v1711 = vsub.f32 %v1709, %v1710
        %v1712 = vand.u32 %v1711, 4294901760
        %1713 = vmatpush.msra.mxu0 %v1712
        %v1714 = vand.u32 %v270, 4294901760
        %v1715 = vsub.f32 %v270, %v1714
        %v1716 = vand.u32 %v1715, 4294901760
        %v1717 = vsub.f32 %v1715, %v1716
        %v1718 = vand.u32 %v1717, 4294901760
        %1719 = vmatpush.msra.mxu0 %v1718
        %v1720 = vand.u32 %v1629, 4294901760
        %1721 = vmatmul.f32.gmra.mxu0 %v1720
        %v1722 = vpop.f32.mrf.mxu0
        %v1723 = vadd.f32 %v1662, %v1722
        %1724 = vdwg.mxu0
        %1725 = vmatpush.msra.mxu0 0.0
        %1726 = vmatpush.msra.mxu0 0.0
        %1727 = vmatpush.msra.mxu0 0.0
        %1728 = vmatpush.msra.mxu0 0.0
        %1729 = vmatpush.msra.mxu0 0.0
        %1730 = vmatpush.msra.mxu0 0.0
        %1731 = vmatpush.msra.mxu0 0.0
        %1732 = vmatpush.msra.mxu0 0.0
        %v1733 = vand.u32 %v277, 4294901760
        %v1734 = vsub.f32 %v277, %v1733
        %1735 = vmatpush.msra.mxu0 %v1734
        %v1736 = vand.u32 %v276, 4294901760
        %v1737 = vsub.f32 %v276, %v1736
        %1738 = vmatpush.msra.mxu0 %v1737
        %v1739 = vand.u32 %v275, 4294901760
        %v1740 = vsub.f32 %v275, %v1739
        %1741 = vmatpush.msra.mxu0 %v1740
        %v1742 = vand.u32 %v274, 4294901760
        %v1743 = vsub.f32 %v274, %v1742
        %1744 = vmatpush.msra.mxu0 %v1743
        %v1745 = vand.u32 %v273, 4294901760
        %v1746 = vsub.f32 %v273, %v1745
        %1747 = vmatpush.msra.mxu0 %v1746
        %v1748 = vand.u32 %v272, 4294901760
        %v1749 = vsub.f32 %v272, %v1748
        %1750 = vmatpush.msra.mxu0 %v1749
        %v1751 = vand.u32 %v271, 4294901760
        %v1752 = vsub.f32 %v271, %v1751
        %1753 = vmatpush.msra.mxu0 %v1752
        %v1754 = vand.u32 %v270, 4294901760
        %v1755 = vsub.f32 %v270, %v1754
        %1756 = vmatpush.msra.mxu0 %v1755
        %v1757 = vand.u32 %v1629, 4294901760
        %v1758 = vsub.f32 %v1629, %v1757
        %1759 = vmatmul.f32.gmra.mxu0 %v1758
        %v1760 = vpop.f32.mrf.mxu0
        %v1761 = vadd.f32 %v1723, %v1760
        %1762 = vdwg.mxu0
        %1763 = vmatpush.msra.mxu0 0.0
        %1764 = vmatpush.msra.mxu0 0.0
        %1765 = vmatpush.msra.mxu0 0.0
        %1766 = vmatpush.msra.mxu0 0.0
        %1767 = vmatpush.msra.mxu0 0.0
        %1768 = vmatpush.msra.mxu0 0.0
        %1769 = vmatpush.msra.mxu0 0.0
        %1770 = vmatpush.msra.mxu0 0.0
        %v1771 = vand.u32 %v277, 4294901760
        %1772 = vmatpush.msra.mxu0 %v1771
        %v1773 = vand.u32 %v276, 4294901760
        %1774 = vmatpush.msra.mxu0 %v1773
        %v1775 = vand.u32 %v275, 4294901760
        %1776 = vmatpush.msra.mxu0 %v1775
        %v1777 = vand.u32 %v274, 4294901760
        %1778 = vmatpush.msra.mxu0 %v1777
        %v1779 = vand.u32 %v273, 4294901760
        %1780 = vmatpush.msra.mxu0 %v1779
        %v1781 = vand.u32 %v272, 4294901760
        %1782 = vmatpush.msra.mxu0 %v1781
        %v1783 = vand.u32 %v271, 4294901760
        %1784 = vmatpush.msra.mxu0 %v1783
        %v1785 = vand.u32 %v270, 4294901760
        %1786 = vmatpush.msra.mxu0 %v1785
        %v1787 = vand.u32 %v1629, 4294901760
        %v1788 = vsub.f32 %v1629, %v1787
        %v1789 = vand.u32 %v1788, 4294901760
        %1790 = vmatmul.f32.gmra.mxu0 %v1789
        %v1791 = vpop.f32.mrf.mxu0
        %v1792 = vadd.f32 %v1761, %v1791
        %1793 = vdwg.mxu0
        %1794 = vmatpush.msra.mxu0 0.0
        %1795 = vmatpush.msra.mxu0 0.0
        %1796 = vmatpush.msra.mxu0 0.0
        %1797 = vmatpush.msra.mxu0 0.0
        %1798 = vmatpush.msra.mxu0 0.0
        %1799 = vmatpush.msra.mxu0 0.0
        %1800 = vmatpush.msra.mxu0 0.0
        %1801 = vmatpush.msra.mxu0 0.0
        %v1802 = vand.u32 %v277, 4294901760
        %v1803 = vsub.f32 %v277, %v1802
        %v1804 = vand.u32 %v1803, 4294901760
        %1805 = vmatpush.msra.mxu0 %v1804
        %v1806 = vand.u32 %v276, 4294901760
        %v1807 = vsub.f32 %v276, %v1806
        %v1808 = vand.u32 %v1807, 4294901760
        %1809 = vmatpush.msra.mxu0 %v1808
        %v1810 = vand.u32 %v275, 4294901760
        %v1811 = vsub.f32 %v275, %v1810
        %v1812 = vand.u32 %v1811, 4294901760
        %1813 = vmatpush.msra.mxu0 %v1812
        %v1814 = vand.u32 %v274, 4294901760
        %v1815 = vsub.f32 %v274, %v1814
        %v1816 = vand.u32 %v1815, 4294901760
        %1817 = vmatpush.msra.mxu0 %v1816
        %v1818 = vand.u32 %v273, 4294901760
        %v1819 = vsub.f32 %v273, %v1818
        %v1820 = vand.u32 %v1819, 4294901760
        %1821 = vmatpush.msra.mxu0 %v1820
        %v1822 = vand.u32 %v272, 4294901760
        %v1823 = vsub.f32 %v272, %v1822
        %v1824 = vand.u32 %v1823, 4294901760
        %1825 = vmatpush.msra.mxu0 %v1824
        %v1826 = vand.u32 %v271, 4294901760
        %v1827 = vsub.f32 %v271, %v1826
        %v1828 = vand.u32 %v1827, 4294901760
        %1829 = vmatpush.msra.mxu0 %v1828
        %v1830 = vand.u32 %v270, 4294901760
        %v1831 = vsub.f32 %v270, %v1830
        %v1832 = vand.u32 %v1831, 4294901760
        %1833 = vmatpush.msra.mxu0 %v1832
        %v1834 = vand.u32 %v1629, 4294901760
        %1835 = vmatmul.f32.gmra.mxu0 %v1834
        %v1836 = vpop.f32.mrf.mxu0
        %v1837 = vadd.f32 %v1792, %v1836
        %1838 = vdwg.mxu0
        %1839 = vmatpush.msra.mxu0 0.0
        %1840 = vmatpush.msra.mxu0 0.0
        %1841 = vmatpush.msra.mxu0 0.0
        %1842 = vmatpush.msra.mxu0 0.0
        %1843 = vmatpush.msra.mxu0 0.0
        %1844 = vmatpush.msra.mxu0 0.0
        %1845 = vmatpush.msra.mxu0 0.0
        %1846 = vmatpush.msra.mxu0 0.0
        %v1847 = vand.u32 %v277, 4294901760
        %1848 = vmatpush.msra.mxu0 %v1847
        %v1849 = vand.u32 %v276, 4294901760
        %1850 = vmatpush.msra.mxu0 %v1849
        %v1851 = vand.u32 %v275, 4294901760
        %1852 = vmatpush.msra.mxu0 %v1851
        %v1853 = vand.u32 %v274, 4294901760
        %1854 = vmatpush.msra.mxu0 %v1853
        %v1855 = vand.u32 %v273, 4294901760
        %1856 = vmatpush.msra.mxu0 %v1855
        %v1857 = vand.u32 %v272, 4294901760
        %1858 = vmatpush.msra.mxu0 %v1857
        %v1859 = vand.u32 %v271, 4294901760
        %1860 = vmatpush.msra.mxu0 %v1859
        %v1861 = vand.u32 %v270, 4294901760
        %1862 = vmatpush.msra.mxu0 %v1861
        %v1863 = vand.u32 %v1629, 4294901760
        %1864 = vmatmul.f32.gmra.mxu0 %v1863
        %v1865 = vpop.f32.mrf.mxu0
        %v1866 = vadd.f32 %v1837, %v1865
        %1867 = vdwg.mxu0
        %v1868 = vperm.slane %v521, 4
        %v1869 = vmul.f32 %v1866, %v1868
        %v1871 = vrot.slane %v1869, 1
        %v1872 = vrot.slane %v1869, 2
        %v1873 = vrot.slane %v1869, 3
        %1877 = vst.msk [vmem:[%s247 + $0x4] sm:$0x1] %vm792, %v1869
        %1878 = vst.msk [vmem:[%s247 + $0xc] sm:$0x1] %vm792, %v1871
        %1879 = vst.msk [vmem:[%s247 + $0x14] sm:$0x1] %vm792, %v1872
        %1880 = vst.msk [vmem:[%s247 + $0x1c] sm:$0x1] %vm792, %v1873
        %v1881 = vld [vmem:[%s259 + $0x5] sm:$0x1]
        %v1882 = vld [vmem:[%s259 + $0xd] sm:$0x1]
        %v1883 = vld [vmem:[%s259 + $0x15] sm:$0x1]
        %v1884 = vld [vmem:[%s259 + $0x1d] sm:$0x1]
        %v1885 = vperm.slane %v269, 5
        %v1886 = vmul.f32 %v1881, %v1885
        %v1887 = vmul.f32 %v1882, %v1885
        %v1888 = vmul.f32 %v1883, %v1885
        %v1889 = vmul.f32 %v1884, %v1885
        %v1894 = vrot.slane %v1887, 7
        %v1895 = vsel %vm536, %v1894, %v1886
        %v1896 = vrot.slane %v1888, 6
        %v1897 = vsel %vm539, %v1896, %v1895
        %v1898 = vrot.slane %v1889, 5
        %v1899 = vsel %vm542, %v1898, %v1897
        %v1900 = vsel %vm263, %v1899, 0
        %1902 = vmatpush.msra.mxu0 0.0
        %1903 = vmatpush.msra.mxu0 0.0
        %1904 = vmatpush.msra.mxu0 0.0
        %1905 = vmatpush.msra.mxu0 0.0
        %1906 = vmatpush.msra.mxu0 0.0
        %1907 = vmatpush.msra.mxu0 0.0
        %1908 = vmatpush.msra.mxu0 0.0
        %1909 = vmatpush.msra.mxu0 0.0
        %v1910 = vand.u32 %v277, 4294901760
        %1911 = vmatpush.msra.mxu0 %v1910
        %v1912 = vand.u32 %v276, 4294901760
        %1913 = vmatpush.msra.mxu0 %v1912
        %v1914 = vand.u32 %v275, 4294901760
        %1915 = vmatpush.msra.mxu0 %v1914
        %v1916 = vand.u32 %v274, 4294901760
        %1917 = vmatpush.msra.mxu0 %v1916
        %v1918 = vand.u32 %v273, 4294901760
        %1919 = vmatpush.msra.mxu0 %v1918
        %v1920 = vand.u32 %v272, 4294901760
        %1921 = vmatpush.msra.mxu0 %v1920
        %v1922 = vand.u32 %v271, 4294901760
        %1923 = vmatpush.msra.mxu0 %v1922
        %v1924 = vand.u32 %v270, 4294901760
        %1925 = vmatpush.msra.mxu0 %v1924
        %v1926 = vand.u32 %v1900, 4294901760
        %v1927 = vsub.f32 %v1900, %v1926
        %v1928 = vand.u32 %v1927, 4294901760
        %v1929 = vsub.f32 %v1927, %v1928
        %v1930 = vand.u32 %v1929, 4294901760
        %1931 = vmatmul.f32.gmra.mxu0 %v1930
        %v1932 = vpop.f32.mrf.mxu0
        %v1933 = vadd.f32 0.0, %v1932
        %1934 = vdwg.mxu0
        %1935 = vmatpush.msra.mxu0 0.0
        %1936 = vmatpush.msra.mxu0 0.0
        %1937 = vmatpush.msra.mxu0 0.0
        %1938 = vmatpush.msra.mxu0 0.0
        %1939 = vmatpush.msra.mxu0 0.0
        %1940 = vmatpush.msra.mxu0 0.0
        %1941 = vmatpush.msra.mxu0 0.0
        %1942 = vmatpush.msra.mxu0 0.0
        %v1943 = vand.u32 %v277, 4294901760
        %v1944 = vsub.f32 %v277, %v1943
        %v1945 = vand.u32 %v1944, 4294901760
        %v1946 = vsub.f32 %v1944, %v1945
        %v1947 = vand.u32 %v1946, 4294901760
        %1948 = vmatpush.msra.mxu0 %v1947
        %v1949 = vand.u32 %v276, 4294901760
        %v1950 = vsub.f32 %v276, %v1949
        %v1951 = vand.u32 %v1950, 4294901760
        %v1952 = vsub.f32 %v1950, %v1951
        %v1953 = vand.u32 %v1952, 4294901760
        %1954 = vmatpush.msra.mxu0 %v1953
        %v1955 = vand.u32 %v275, 4294901760
        %v1956 = vsub.f32 %v275, %v1955
        %v1957 = vand.u32 %v1956, 4294901760
        %v1958 = vsub.f32 %v1956, %v1957
        %v1959 = vand.u32 %v1958, 4294901760
        %1960 = vmatpush.msra.mxu0 %v1959
        %v1961 = vand.u32 %v274, 4294901760
        %v1962 = vsub.f32 %v274, %v1961
        %v1963 = vand.u32 %v1962, 4294901760
        %v1964 = vsub.f32 %v1962, %v1963
        %v1965 = vand.u32 %v1964, 4294901760
        %1966 = vmatpush.msra.mxu0 %v1965
        %v1967 = vand.u32 %v273, 4294901760
        %v1968 = vsub.f32 %v273, %v1967
        %v1969 = vand.u32 %v1968, 4294901760
        %v1970 = vsub.f32 %v1968, %v1969
        %v1971 = vand.u32 %v1970, 4294901760
        %1972 = vmatpush.msra.mxu0 %v1971
        %v1973 = vand.u32 %v272, 4294901760
        %v1974 = vsub.f32 %v272, %v1973
        %v1975 = vand.u32 %v1974, 4294901760
        %v1976 = vsub.f32 %v1974, %v1975
        %v1977 = vand.u32 %v1976, 4294901760
        %1978 = vmatpush.msra.mxu0 %v1977
        %v1979 = vand.u32 %v271, 4294901760
        %v1980 = vsub.f32 %v271, %v1979
        %v1981 = vand.u32 %v1980, 4294901760
        %v1982 = vsub.f32 %v1980, %v1981
        %v1983 = vand.u32 %v1982, 4294901760
        %1984 = vmatpush.msra.mxu0 %v1983
        %v1985 = vand.u32 %v270, 4294901760
        %v1986 = vsub.f32 %v270, %v1985
        %v1987 = vand.u32 %v1986, 4294901760
        %v1988 = vsub.f32 %v1986, %v1987
        %v1989 = vand.u32 %v1988, 4294901760
        %1990 = vmatpush.msra.mxu0 %v1989
        %v1991 = vand.u32 %v1900, 4294901760
        %1992 = vmatmul.f32.gmra.mxu0 %v1991
        %v1993 = vpop.f32.mrf.mxu0
        %v1994 = vadd.f32 %v1933, %v1993
        %1995 = vdwg.mxu0
        %1996 = vmatpush.msra.mxu0 0.0
        %1997 = vmatpush.msra.mxu0 0.0
        %1998 = vmatpush.msra.mxu0 0.0
        %1999 = vmatpush.msra.mxu0 0.0
        %2000 = vmatpush.msra.mxu0 0.0
        %2001 = vmatpush.msra.mxu0 0.0
        %2002 = vmatpush.msra.mxu0 0.0
        %2003 = vmatpush.msra.mxu0 0.0
        %v2004 = vand.u32 %v277, 4294901760
        %v2005 = vsub.f32 %v277, %v2004
        %2006 = vmatpush.msra.mxu0 %v2005
        %v2007 = vand.u32 %v276, 4294901760
        %v2008 = vsub.f32 %v276, %v2007
        %2009 = vmatpush.msra.mxu0 %v2008
        %v2010 = vand.u32 %v275, 4294901760
        %v2011 = vsub.f32 %v275, %v2010
        %2012 = vmatpush.msra.mxu0 %v2011
        %v2013 = vand.u32 %v274, 4294901760
        %v2014 = vsub.f32 %v274, %v2013
        %2015 = vmatpush.msra.mxu0 %v2014
        %v2016 = vand.u32 %v273, 4294901760
        %v2017 = vsub.f32 %v273, %v2016
        %2018 = vmatpush.msra.mxu0 %v2017
        %v2019 = vand.u32 %v272, 4294901760
        %v2020 = vsub.f32 %v272, %v2019
        %2021 = vmatpush.msra.mxu0 %v2020
        %v2022 = vand.u32 %v271, 4294901760
        %v2023 = vsub.f32 %v271, %v2022
        %2024 = vmatpush.msra.mxu0 %v2023
        %v2025 = vand.u32 %v270, 4294901760
        %v2026 = vsub.f32 %v270, %v2025
        %2027 = vmatpush.msra.mxu0 %v2026
        %v2028 = vand.u32 %v1900, 4294901760
        %v2029 = vsub.f32 %v1900, %v2028
        %2030 = vmatmul.f32.gmra.mxu0 %v2029
        %v2031 = vpop.f32.mrf.mxu0
        %v2032 = vadd.f32 %v1994, %v2031
        %2033 = vdwg.mxu0
        %2034 = vmatpush.msra.mxu0 0.0
        %2035 = vmatpush.msra.mxu0 0.0
        %2036 = vmatpush.msra.mxu0 0.0
        %2037 = vmatpush.msra.mxu0 0.0
        %2038 = vmatpush.msra.mxu0 0.0
        %2039 = vmatpush.msra.mxu0 0.0
        %2040 = vmatpush.msra.mxu0 0.0
        %2041 = vmatpush.msra.mxu0 0.0
        %v2042 = vand.u32 %v277, 4294901760
        %2043 = vmatpush.msra.mxu0 %v2042
        %v2044 = vand.u32 %v276, 4294901760
        %2045 = vmatpush.msra.mxu0 %v2044
        %v2046 = vand.u32 %v275, 4294901760
        %2047 = vmatpush.msra.mxu0 %v2046
        %v2048 = vand.u32 %v274, 4294901760
        %2049 = vmatpush.msra.mxu0 %v2048
        %v2050 = vand.u32 %v273, 4294901760
        %2051 = vmatpush.msra.mxu0 %v2050
        %v2052 = vand.u32 %v272, 4294901760
        %2053 = vmatpush.msra.mxu0 %v2052
        %v2054 = vand.u32 %v271, 4294901760
        %2055 = vmatpush.msra.mxu0 %v2054
        %v2056 = vand.u32 %v270, 4294901760
        %2057 = vmatpush.msra.mxu0 %v2056
        %v2058 = vand.u32 %v1900, 4294901760
        %v2059 = vsub.f32 %v1900, %v2058
        %v2060 = vand.u32 %v2059, 4294901760
        %2061 = vmatmul.f32.gmra.mxu0 %v2060
        %v2062 = vpop.f32.mrf.mxu0
        %v2063 = vadd.f32 %v2032, %v2062
        %2064 = vdwg.mxu0
        %2065 = vmatpush.msra.mxu0 0.0
        %2066 = vmatpush.msra.mxu0 0.0
        %2067 = vmatpush.msra.mxu0 0.0
        %2068 = vmatpush.msra.mxu0 0.0
        %2069 = vmatpush.msra.mxu0 0.0
        %2070 = vmatpush.msra.mxu0 0.0
        %2071 = vmatpush.msra.mxu0 0.0
        %2072 = vmatpush.msra.mxu0 0.0
        %v2073 = vand.u32 %v277, 4294901760
        %v2074 = vsub.f32 %v277, %v2073
        %v2075 = vand.u32 %v2074, 4294901760
        %2076 = vmatpush.msra.mxu0 %v2075
        %v2077 = vand.u32 %v276, 4294901760
        %v2078 = vsub.f32 %v276, %v2077
        %v2079 = vand.u32 %v2078, 4294901760
        %2080 = vmatpush.msra.mxu0 %v2079
        %v2081 = vand.u32 %v275, 4294901760
        %v2082 = vsub.f32 %v275, %v2081
        %v2083 = vand.u32 %v2082, 4294901760
        %2084 = vmatpush.msra.mxu0 %v2083
        %v2085 = vand.u32 %v274, 4294901760
        %v2086 = vsub.f32 %v274, %v2085
        %v2087 = vand.u32 %v2086, 4294901760
        %2088 = vmatpush.msra.mxu0 %v2087
        %v2089 = vand.u32 %v273, 4294901760
        %v2090 = vsub.f32 %v273, %v2089
        %v2091 = vand.u32 %v2090, 4294901760
        %2092 = vmatpush.msra.mxu0 %v2091
        %v2093 = vand.u32 %v272, 4294901760
        %v2094 = vsub.f32 %v272, %v2093
        %v2095 = vand.u32 %v2094, 4294901760
        %2096 = vmatpush.msra.mxu0 %v2095
        %v2097 = vand.u32 %v271, 4294901760
        %v2098 = vsub.f32 %v271, %v2097
        %v2099 = vand.u32 %v2098, 4294901760
        %2100 = vmatpush.msra.mxu0 %v2099
        %v2101 = vand.u32 %v270, 4294901760
        %v2102 = vsub.f32 %v270, %v2101
        %v2103 = vand.u32 %v2102, 4294901760
        %2104 = vmatpush.msra.mxu0 %v2103
        %v2105 = vand.u32 %v1900, 4294901760
        %2106 = vmatmul.f32.gmra.mxu0 %v2105
        %v2107 = vpop.f32.mrf.mxu0
        %v2108 = vadd.f32 %v2063, %v2107
        %2109 = vdwg.mxu0
        %2110 = vmatpush.msra.mxu0 0.0
        %2111 = vmatpush.msra.mxu0 0.0
        %2112 = vmatpush.msra.mxu0 0.0
        %2113 = vmatpush.msra.mxu0 0.0
        %2114 = vmatpush.msra.mxu0 0.0
        %2115 = vmatpush.msra.mxu0 0.0
        %2116 = vmatpush.msra.mxu0 0.0
        %2117 = vmatpush.msra.mxu0 0.0
        %v2118 = vand.u32 %v277, 4294901760
        %2119 = vmatpush.msra.mxu0 %v2118
        %v2120 = vand.u32 %v276, 4294901760
        %2121 = vmatpush.msra.mxu0 %v2120
        %v2122 = vand.u32 %v275, 4294901760
        %2123 = vmatpush.msra.mxu0 %v2122
        %v2124 = vand.u32 %v274, 4294901760
        %2125 = vmatpush.msra.mxu0 %v2124
        %v2126 = vand.u32 %v273, 4294901760
        %2127 = vmatpush.msra.mxu0 %v2126
        %v2128 = vand.u32 %v272, 4294901760
        %2129 = vmatpush.msra.mxu0 %v2128
        %v2130 = vand.u32 %v271, 4294901760
        %2131 = vmatpush.msra.mxu0 %v2130
        %v2132 = vand.u32 %v270, 4294901760
        %2133 = vmatpush.msra.mxu0 %v2132
        %v2134 = vand.u32 %v1900, 4294901760
        %2135 = vmatmul.f32.gmra.mxu0 %v2134
        %v2136 = vpop.f32.mrf.mxu0
        %v2137 = vadd.f32 %v2108, %v2136
        %2138 = vdwg.mxu0
        %v2139 = vperm.slane %v521, 5
        %v2140 = vmul.f32 %v2137, %v2139
        %v2142 = vrot.slane %v2140, 1
        %v2143 = vrot.slane %v2140, 2
        %v2144 = vrot.slane %v2140, 3
        %2148 = vst.msk [vmem:[%s247 + $0x5] sm:$0x1] %vm792, %v2140
        %2149 = vst.msk [vmem:[%s247 + $0xd] sm:$0x1] %vm792, %v2142
        %2150 = vst.msk [vmem:[%s247 + $0x15] sm:$0x1] %vm792, %v2143
        %2151 = vst.msk [vmem:[%s247 + $0x1d] sm:$0x1] %vm792, %v2144
        %v2152 = vld [vmem:[%s259 + $0x6] sm:$0x1]
        %v2153 = vld [vmem:[%s259 + $0xe] sm:$0x1]
        %v2154 = vld [vmem:[%s259 + $0x16] sm:$0x1]
        %v2155 = vld [vmem:[%s259 + $0x1e] sm:$0x1]
        %v2156 = vperm.slane %v269, 6
        %v2157 = vmul.f32 %v2152, %v2156
        %v2158 = vmul.f32 %v2153, %v2156
        %v2159 = vmul.f32 %v2154, %v2156
        %v2160 = vmul.f32 %v2155, %v2156
        %v2165 = vrot.slane %v2158, 7
        %v2166 = vsel %vm536, %v2165, %v2157
        %v2167 = vrot.slane %v2159, 6
        %v2168 = vsel %vm539, %v2167, %v2166
        %v2169 = vrot.slane %v2160, 5
        %v2170 = vsel %vm542, %v2169, %v2168
        %v2171 = vsel %vm263, %v2170, 0
        %2173 = vmatpush.msra.mxu0 0.0
        %2174 = vmatpush.msra.mxu0 0.0
        %2175 = vmatpush.msra.mxu0 0.0
        %2176 = vmatpush.msra.mxu0 0.0
        %2177 = vmatpush.msra.mxu0 0.0
        %2178 = vmatpush.msra.mxu0 0.0
        %2179 = vmatpush.msra.mxu0 0.0
        %2180 = vmatpush.msra.mxu0 0.0
        %v2181 = vand.u32 %v277, 4294901760
        %2182 = vmatpush.msra.mxu0 %v2181
        %v2183 = vand.u32 %v276, 4294901760
        %2184 = vmatpush.msra.mxu0 %v2183
        %v2185 = vand.u32 %v275, 4294901760
        %2186 = vmatpush.msra.mxu0 %v2185
        %v2187 = vand.u32 %v274, 4294901760
        %2188 = vmatpush.msra.mxu0 %v2187
        %v2189 = vand.u32 %v273, 4294901760
        %2190 = vmatpush.msra.mxu0 %v2189
        %v2191 = vand.u32 %v272, 4294901760
        %2192 = vmatpush.msra.mxu0 %v2191
        %v2193 = vand.u32 %v271, 4294901760
        %2194 = vmatpush.msra.mxu0 %v2193
        %v2195 = vand.u32 %v270, 4294901760
        %2196 = vmatpush.msra.mxu0 %v2195
        %v2197 = vand.u32 %v2171, 4294901760
        %v2198 = vsub.f32 %v2171, %v2197
        %v2199 = vand.u32 %v2198, 4294901760
        %v2200 = vsub.f32 %v2198, %v2199
        %v2201 = vand.u32 %v2200, 4294901760
        %2202 = vmatmul.f32.gmra.mxu0 %v2201
        %v2203 = vpop.f32.mrf.mxu0
        %v2204 = vadd.f32 0.0, %v2203
        %2205 = vdwg.mxu0
        %2206 = vmatpush.msra.mxu0 0.0
        %2207 = vmatpush.msra.mxu0 0.0
        %2208 = vmatpush.msra.mxu0 0.0
        %2209 = vmatpush.msra.mxu0 0.0
        %2210 = vmatpush.msra.mxu0 0.0
        %2211 = vmatpush.msra.mxu0 0.0
        %2212 = vmatpush.msra.mxu0 0.0
        %2213 = vmatpush.msra.mxu0 0.0
        %v2214 = vand.u32 %v277, 4294901760
        %v2215 = vsub.f32 %v277, %v2214
        %v2216 = vand.u32 %v2215, 4294901760
        %v2217 = vsub.f32 %v2215, %v2216
        %v2218 = vand.u32 %v2217, 4294901760
        %2219 = vmatpush.msra.mxu0 %v2218
        %v2220 = vand.u32 %v276, 4294901760
        %v2221 = vsub.f32 %v276, %v2220
        %v2222 = vand.u32 %v2221, 4294901760
        %v2223 = vsub.f32 %v2221, %v2222
        %v2224 = vand.u32 %v2223, 4294901760
        %2225 = vmatpush.msra.mxu0 %v2224
        %v2226 = vand.u32 %v275, 4294901760
        %v2227 = vsub.f32 %v275, %v2226
        %v2228 = vand.u32 %v2227, 4294901760
        %v2229 = vsub.f32 %v2227, %v2228
        %v2230 = vand.u32 %v2229, 4294901760
        %2231 = vmatpush.msra.mxu0 %v2230
        %v2232 = vand.u32 %v274, 4294901760
        %v2233 = vsub.f32 %v274, %v2232
        %v2234 = vand.u32 %v2233, 4294901760
        %v2235 = vsub.f32 %v2233, %v2234
        %v2236 = vand.u32 %v2235, 4294901760
        %2237 = vmatpush.msra.mxu0 %v2236
        %v2238 = vand.u32 %v273, 4294901760
        %v2239 = vsub.f32 %v273, %v2238
        %v2240 = vand.u32 %v2239, 4294901760
        %v2241 = vsub.f32 %v2239, %v2240
        %v2242 = vand.u32 %v2241, 4294901760
        %2243 = vmatpush.msra.mxu0 %v2242
        %v2244 = vand.u32 %v272, 4294901760
        %v2245 = vsub.f32 %v272, %v2244
        %v2246 = vand.u32 %v2245, 4294901760
        %v2247 = vsub.f32 %v2245, %v2246
        %v2248 = vand.u32 %v2247, 4294901760
        %2249 = vmatpush.msra.mxu0 %v2248
        %v2250 = vand.u32 %v271, 4294901760
        %v2251 = vsub.f32 %v271, %v2250
        %v2252 = vand.u32 %v2251, 4294901760
        %v2253 = vsub.f32 %v2251, %v2252
        %v2254 = vand.u32 %v2253, 4294901760
        %2255 = vmatpush.msra.mxu0 %v2254
        %v2256 = vand.u32 %v270, 4294901760
        %v2257 = vsub.f32 %v270, %v2256
        %v2258 = vand.u32 %v2257, 4294901760
        %v2259 = vsub.f32 %v2257, %v2258
        %v2260 = vand.u32 %v2259, 4294901760
        %2261 = vmatpush.msra.mxu0 %v2260
        %v2262 = vand.u32 %v2171, 4294901760
        %2263 = vmatmul.f32.gmra.mxu0 %v2262
        %v2264 = vpop.f32.mrf.mxu0
        %v2265 = vadd.f32 %v2204, %v2264
        %2266 = vdwg.mxu0
        %2267 = vmatpush.msra.mxu0 0.0
        %2268 = vmatpush.msra.mxu0 0.0
        %2269 = vmatpush.msra.mxu0 0.0
        %2270 = vmatpush.msra.mxu0 0.0
        %2271 = vmatpush.msra.mxu0 0.0
        %2272 = vmatpush.msra.mxu0 0.0
        %2273 = vmatpush.msra.mxu0 0.0
        %2274 = vmatpush.msra.mxu0 0.0
        %v2275 = vand.u32 %v277, 4294901760
        %v2276 = vsub.f32 %v277, %v2275
        %2277 = vmatpush.msra.mxu0 %v2276
        %v2278 = vand.u32 %v276, 4294901760
        %v2279 = vsub.f32 %v276, %v2278
        %2280 = vmatpush.msra.mxu0 %v2279
        %v2281 = vand.u32 %v275, 4294901760
        %v2282 = vsub.f32 %v275, %v2281
        %2283 = vmatpush.msra.mxu0 %v2282
        %v2284 = vand.u32 %v274, 4294901760
        %v2285 = vsub.f32 %v274, %v2284
        %2286 = vmatpush.msra.mxu0 %v2285
        %v2287 = vand.u32 %v273, 4294901760
        %v2288 = vsub.f32 %v273, %v2287
        %2289 = vmatpush.msra.mxu0 %v2288
        %v2290 = vand.u32 %v272, 4294901760
        %v2291 = vsub.f32 %v272, %v2290
        %2292 = vmatpush.msra.mxu0 %v2291
        %v2293 = vand.u32 %v271, 4294901760
        %v2294 = vsub.f32 %v271, %v2293
        %2295 = vmatpush.msra.mxu0 %v2294
        %v2296 = vand.u32 %v270, 4294901760
        %v2297 = vsub.f32 %v270, %v2296
        %2298 = vmatpush.msra.mxu0 %v2297
        %v2299 = vand.u32 %v2171, 4294901760
        %v2300 = vsub.f32 %v2171, %v2299
        %2301 = vmatmul.f32.gmra.mxu0 %v2300
        %v2302 = vpop.f32.mrf.mxu0
        %v2303 = vadd.f32 %v2265, %v2302
        %2304 = vdwg.mxu0
        %2305 = vmatpush.msra.mxu0 0.0
        %2306 = vmatpush.msra.mxu0 0.0
        %2307 = vmatpush.msra.mxu0 0.0
        %2308 = vmatpush.msra.mxu0 0.0
        %2309 = vmatpush.msra.mxu0 0.0
        %2310 = vmatpush.msra.mxu0 0.0
        %2311 = vmatpush.msra.mxu0 0.0
        %2312 = vmatpush.msra.mxu0 0.0
        %v2313 = vand.u32 %v277, 4294901760
        %2314 = vmatpush.msra.mxu0 %v2313
        %v2315 = vand.u32 %v276, 4294901760
        %2316 = vmatpush.msra.mxu0 %v2315
        %v2317 = vand.u32 %v275, 4294901760
        %2318 = vmatpush.msra.mxu0 %v2317
        %v2319 = vand.u32 %v274, 4294901760
        %2320 = vmatpush.msra.mxu0 %v2319
        %v2321 = vand.u32 %v273, 4294901760
        %2322 = vmatpush.msra.mxu0 %v2321
        %v2323 = vand.u32 %v272, 4294901760
        %2324 = vmatpush.msra.mxu0 %v2323
        %v2325 = vand.u32 %v271, 4294901760
        %2326 = vmatpush.msra.mxu0 %v2325
        %v2327 = vand.u32 %v270, 4294901760
        %2328 = vmatpush.msra.mxu0 %v2327
        %v2329 = vand.u32 %v2171, 4294901760
        %v2330 = vsub.f32 %v2171, %v2329
        %v2331 = vand.u32 %v2330, 4294901760
        %2332 = vmatmul.f32.gmra.mxu0 %v2331
        %v2333 = vpop.f32.mrf.mxu0
        %v2334 = vadd.f32 %v2303, %v2333
        %2335 = vdwg.mxu0
        %2336 = vmatpush.msra.mxu0 0.0
        %2337 = vmatpush.msra.mxu0 0.0
        %2338 = vmatpush.msra.mxu0 0.0
        %2339 = vmatpush.msra.mxu0 0.0
        %2340 = vmatpush.msra.mxu0 0.0
        %2341 = vmatpush.msra.mxu0 0.0
        %2342 = vmatpush.msra.mxu0 0.0
        %2343 = vmatpush.msra.mxu0 0.0
        %v2344 = vand.u32 %v277, 4294901760
        %v2345 = vsub.f32 %v277, %v2344
        %v2346 = vand.u32 %v2345, 4294901760
        %2347 = vmatpush.msra.mxu0 %v2346
        %v2348 = vand.u32 %v276, 4294901760
        %v2349 = vsub.f32 %v276, %v2348
        %v2350 = vand.u32 %v2349, 4294901760
        %2351 = vmatpush.msra.mxu0 %v2350
        %v2352 = vand.u32 %v275, 4294901760
        %v2353 = vsub.f32 %v275, %v2352
        %v2354 = vand.u32 %v2353, 4294901760
        %2355 = vmatpush.msra.mxu0 %v2354
        %v2356 = vand.u32 %v274, 4294901760
        %v2357 = vsub.f32 %v274, %v2356
        %v2358 = vand.u32 %v2357, 4294901760
        %2359 = vmatpush.msra.mxu0 %v2358
        %v2360 = vand.u32 %v273, 4294901760
        %v2361 = vsub.f32 %v273, %v2360
        %v2362 = vand.u32 %v2361, 4294901760
        %2363 = vmatpush.msra.mxu0 %v2362
        %v2364 = vand.u32 %v272, 4294901760
        %v2365 = vsub.f32 %v272, %v2364
        %v2366 = vand.u32 %v2365, 4294901760
        %2367 = vmatpush.msra.mxu0 %v2366
        %v2368 = vand.u32 %v271, 4294901760
        %v2369 = vsub.f32 %v271, %v2368
        %v2370 = vand.u32 %v2369, 4294901760
        %2371 = vmatpush.msra.mxu0 %v2370
        %v2372 = vand.u32 %v270, 4294901760
        %v2373 = vsub.f32 %v270, %v2372
        %v2374 = vand.u32 %v2373, 4294901760
        %2375 = vmatpush.msra.mxu0 %v2374
        %v2376 = vand.u32 %v2171, 4294901760
        %2377 = vmatmul.f32.gmra.mxu0 %v2376
        %v2378 = vpop.f32.mrf.mxu0
        %v2379 = vadd.f32 %v2334, %v2378
        %2380 = vdwg.mxu0
        %2381 = vmatpush.msra.mxu0 0.0
        %2382 = vmatpush.msra.mxu0 0.0
        %2383 = vmatpush.msra.mxu0 0.0
        %2384 = vmatpush.msra.mxu0 0.0
        %2385 = vmatpush.msra.mxu0 0.0
        %2386 = vmatpush.msra.mxu0 0.0
        %2387 = vmatpush.msra.mxu0 0.0
        %2388 = vmatpush.msra.mxu0 0.0
        %v2389 = vand.u32 %v277, 4294901760
        %2390 = vmatpush.msra.mxu0 %v2389
        %v2391 = vand.u32 %v276, 4294901760
        %2392 = vmatpush.msra.mxu0 %v2391
        %v2393 = vand.u32 %v275, 4294901760
        %2394 = vmatpush.msra.mxu0 %v2393
        %v2395 = vand.u32 %v274, 4294901760
        %2396 = vmatpush.msra.mxu0 %v2395
        %v2397 = vand.u32 %v273, 4294901760
        %2398 = vmatpush.msra.mxu0 %v2397
        %v2399 = vand.u32 %v272, 4294901760
        %2400 = vmatpush.msra.mxu0 %v2399
        %v2401 = vand.u32 %v271, 4294901760
        %2402 = vmatpush.msra.mxu0 %v2401
        %v2403 = vand.u32 %v270, 4294901760
        %2404 = vmatpush.msra.mxu0 %v2403
        %v2405 = vand.u32 %v2171, 4294901760
        %2406 = vmatmul.f32.gmra.mxu0 %v2405
        %v2407 = vpop.f32.mrf.mxu0
        %v2408 = vadd.f32 %v2379, %v2407
        %2409 = vdwg.mxu0
        %v2410 = vperm.slane %v521, 6
        %v2411 = vmul.f32 %v2408, %v2410
        %v2413 = vrot.slane %v2411, 1
        %v2414 = vrot.slane %v2411, 2
        %v2415 = vrot.slane %v2411, 3
        %2419 = vst.msk [vmem:[%s247 + $0x6] sm:$0x1] %vm792, %v2411
        %2420 = vst.msk [vmem:[%s247 + $0xe] sm:$0x1] %vm792, %v2413
        %2421 = vst.msk [vmem:[%s247 + $0x16] sm:$0x1] %vm792, %v2414
        %2422 = vst.msk [vmem:[%s247 + $0x1e] sm:$0x1] %vm792, %v2415
        %v2423 = vld [vmem:[%s259 + $0x7] sm:$0x1]
        %v2424 = vld [vmem:[%s259 + $0xf] sm:$0x1]
        %v2425 = vld [vmem:[%s259 + $0x17] sm:$0x1]
        %v2426 = vld [vmem:[%s259 + $0x1f] sm:$0x1]
        %v2427 = vperm.slane %v269, 7
        %v2428 = vmul.f32 %v2423, %v2427
        %v2429 = vmul.f32 %v2424, %v2427
        %v2430 = vmul.f32 %v2425, %v2427
        %v2431 = vmul.f32 %v2426, %v2427
        %v2436 = vrot.slane %v2429, 7
        %v2437 = vsel %vm536, %v2436, %v2428
        %v2438 = vrot.slane %v2430, 6
        %v2439 = vsel %vm539, %v2438, %v2437
        %v2440 = vrot.slane %v2431, 5
        %v2441 = vsel %vm542, %v2440, %v2439
        %v2442 = vsel %vm263, %v2441, 0
        %2444 = vmatpush.msra.mxu0 0.0
        %2445 = vmatpush.msra.mxu0 0.0
        %2446 = vmatpush.msra.mxu0 0.0
        %2447 = vmatpush.msra.mxu0 0.0
        %2448 = vmatpush.msra.mxu0 0.0
        %2449 = vmatpush.msra.mxu0 0.0
        %2450 = vmatpush.msra.mxu0 0.0
        %2451 = vmatpush.msra.mxu0 0.0
        %v2452 = vand.u32 %v277, 4294901760
        %2453 = vmatpush.msra.mxu0 %v2452
        %v2454 = vand.u32 %v276, 4294901760
        %2455 = vmatpush.msra.mxu0 %v2454
        %v2456 = vand.u32 %v275, 4294901760
        %2457 = vmatpush.msra.mxu0 %v2456
        %v2458 = vand.u32 %v274, 4294901760
        %2459 = vmatpush.msra.mxu0 %v2458
        %v2460 = vand.u32 %v273, 4294901760
        %2461 = vmatpush.msra.mxu0 %v2460
        %v2462 = vand.u32 %v272, 4294901760
        %2463 = vmatpush.msra.mxu0 %v2462
        %v2464 = vand.u32 %v271, 4294901760
        %2465 = vmatpush.msra.mxu0 %v2464
        %v2466 = vand.u32 %v270, 4294901760
        %2467 = vmatpush.msra.mxu0 %v2466
        %v2468 = vand.u32 %v2442, 4294901760
        %v2469 = vsub.f32 %v2442, %v2468
        %v2470 = vand.u32 %v2469, 4294901760
        %v2471 = vsub.f32 %v2469, %v2470
        %v2472 = vand.u32 %v2471, 4294901760
        %2473 = vmatmul.f32.gmra.mxu0 %v2472
        %v2474 = vpop.f32.mrf.mxu0
        %v2475 = vadd.f32 0.0, %v2474
        %2476 = vdwg.mxu0
        %2477 = vmatpush.msra.mxu0 0.0
        %2478 = vmatpush.msra.mxu0 0.0
        %2479 = vmatpush.msra.mxu0 0.0
        %2480 = vmatpush.msra.mxu0 0.0
        %2481 = vmatpush.msra.mxu0 0.0
        %2482 = vmatpush.msra.mxu0 0.0
        %2483 = vmatpush.msra.mxu0 0.0
        %2484 = vmatpush.msra.mxu0 0.0
        %v2485 = vand.u32 %v277, 4294901760
        %v2486 = vsub.f32 %v277, %v2485
        %v2487 = vand.u32 %v2486, 4294901760
        %v2488 = vsub.f32 %v2486, %v2487
        %v2489 = vand.u32 %v2488, 4294901760
        %2490 = vmatpush.msra.mxu0 %v2489
        %v2491 = vand.u32 %v276, 4294901760
        %v2492 = vsub.f32 %v276, %v2491
        %v2493 = vand.u32 %v2492, 4294901760
        %v2494 = vsub.f32 %v2492, %v2493
        %v2495 = vand.u32 %v2494, 4294901760
        %2496 = vmatpush.msra.mxu0 %v2495
        %v2497 = vand.u32 %v275, 4294901760
        %v2498 = vsub.f32 %v275, %v2497
        %v2499 = vand.u32 %v2498, 4294901760
        %v2500 = vsub.f32 %v2498, %v2499
        %v2501 = vand.u32 %v2500, 4294901760
        %2502 = vmatpush.msra.mxu0 %v2501
        %v2503 = vand.u32 %v274, 4294901760
        %v2504 = vsub.f32 %v274, %v2503
        %v2505 = vand.u32 %v2504, 4294901760
        %v2506 = vsub.f32 %v2504, %v2505
        %v2507 = vand.u32 %v2506, 4294901760
        %2508 = vmatpush.msra.mxu0 %v2507
        %v2509 = vand.u32 %v273, 4294901760
        %v2510 = vsub.f32 %v273, %v2509
        %v2511 = vand.u32 %v2510, 4294901760
        %v2512 = vsub.f32 %v2510, %v2511
        %v2513 = vand.u32 %v2512, 4294901760
        %2514 = vmatpush.msra.mxu0 %v2513
        %v2515 = vand.u32 %v272, 4294901760
        %v2516 = vsub.f32 %v272, %v2515
        %v2517 = vand.u32 %v2516, 4294901760
        %v2518 = vsub.f32 %v2516, %v2517
        %v2519 = vand.u32 %v2518, 4294901760
        %2520 = vmatpush.msra.mxu0 %v2519
        %v2521 = vand.u32 %v271, 4294901760
        %v2522 = vsub.f32 %v271, %v2521
        %v2523 = vand.u32 %v2522, 4294901760
        %v2524 = vsub.f32 %v2522, %v2523
        %v2525 = vand.u32 %v2524, 4294901760
        %2526 = vmatpush.msra.mxu0 %v2525
        %v2527 = vand.u32 %v270, 4294901760
        %v2528 = vsub.f32 %v270, %v2527
        %v2529 = vand.u32 %v2528, 4294901760
        %v2530 = vsub.f32 %v2528, %v2529
        %v2531 = vand.u32 %v2530, 4294901760
        %2532 = vmatpush.msra.mxu0 %v2531
        %v2533 = vand.u32 %v2442, 4294901760
        %2534 = vmatmul.f32.gmra.mxu0 %v2533
        %v2535 = vpop.f32.mrf.mxu0
        %v2536 = vadd.f32 %v2475, %v2535
        %2537 = vdwg.mxu0
        %2538 = vmatpush.msra.mxu0 0.0
        %2539 = vmatpush.msra.mxu0 0.0
        %2540 = vmatpush.msra.mxu0 0.0
        %2541 = vmatpush.msra.mxu0 0.0
        %2542 = vmatpush.msra.mxu0 0.0
        %2543 = vmatpush.msra.mxu0 0.0
        %2544 = vmatpush.msra.mxu0 0.0
        %2545 = vmatpush.msra.mxu0 0.0
        %v2546 = vand.u32 %v277, 4294901760
        %v2547 = vsub.f32 %v277, %v2546
        %2548 = vmatpush.msra.mxu0 %v2547
        %v2549 = vand.u32 %v276, 4294901760
        %v2550 = vsub.f32 %v276, %v2549
        %2551 = vmatpush.msra.mxu0 %v2550
        %v2552 = vand.u32 %v275, 4294901760
        %v2553 = vsub.f32 %v275, %v2552
        %2554 = vmatpush.msra.mxu0 %v2553
        %v2555 = vand.u32 %v274, 4294901760
        %v2556 = vsub.f32 %v274, %v2555
        %2557 = vmatpush.msra.mxu0 %v2556
        %v2558 = vand.u32 %v273, 4294901760
        %v2559 = vsub.f32 %v273, %v2558
        %2560 = vmatpush.msra.mxu0 %v2559
        %v2561 = vand.u32 %v272, 4294901760
        %v2562 = vsub.f32 %v272, %v2561
        %2563 = vmatpush.msra.mxu0 %v2562
        %v2564 = vand.u32 %v271, 4294901760
        %v2565 = vsub.f32 %v271, %v2564
        %2566 = vmatpush.msra.mxu0 %v2565
        %v2567 = vand.u32 %v270, 4294901760
        %v2568 = vsub.f32 %v270, %v2567
        %2569 = vmatpush.msra.mxu0 %v2568
        %v2570 = vand.u32 %v2442, 4294901760
        %v2571 = vsub.f32 %v2442, %v2570
        %2572 = vmatmul.f32.gmra.mxu0 %v2571
        %v2573 = vpop.f32.mrf.mxu0
        %v2574 = vadd.f32 %v2536, %v2573
        %2575 = vdwg.mxu0
        %2576 = vmatpush.msra.mxu0 0.0
        %2577 = vmatpush.msra.mxu0 0.0
        %2578 = vmatpush.msra.mxu0 0.0
        %2579 = vmatpush.msra.mxu0 0.0
        %2580 = vmatpush.msra.mxu0 0.0
        %2581 = vmatpush.msra.mxu0 0.0
        %2582 = vmatpush.msra.mxu0 0.0
        %2583 = vmatpush.msra.mxu0 0.0
        %v2584 = vand.u32 %v277, 4294901760
        %2585 = vmatpush.msra.mxu0 %v2584
        %v2586 = vand.u32 %v276, 4294901760
        %2587 = vmatpush.msra.mxu0 %v2586
        %v2588 = vand.u32 %v275, 4294901760
        %2589 = vmatpush.msra.mxu0 %v2588
        %v2590 = vand.u32 %v274, 4294901760
        %2591 = vmatpush.msra.mxu0 %v2590
        %v2592 = vand.u32 %v273, 4294901760
        %2593 = vmatpush.msra.mxu0 %v2592
        %v2594 = vand.u32 %v272, 4294901760
        %2595 = vmatpush.msra.mxu0 %v2594
        %v2596 = vand.u32 %v271, 4294901760
        %2597 = vmatpush.msra.mxu0 %v2596
        %v2598 = vand.u32 %v270, 4294901760
        %2599 = vmatpush.msra.mxu0 %v2598
        %v2600 = vand.u32 %v2442, 4294901760
        %v2601 = vsub.f32 %v2442, %v2600
        %v2602 = vand.u32 %v2601, 4294901760
        %2603 = vmatmul.f32.gmra.mxu0 %v2602
        %v2604 = vpop.f32.mrf.mxu0
        %v2605 = vadd.f32 %v2574, %v2604
        %2606 = vdwg.mxu0
        %2607 = vmatpush.msra.mxu0 0.0
        %2608 = vmatpush.msra.mxu0 0.0
        %2609 = vmatpush.msra.mxu0 0.0
        %2610 = vmatpush.msra.mxu0 0.0
        %2611 = vmatpush.msra.mxu0 0.0
        %2612 = vmatpush.msra.mxu0 0.0
        %2613 = vmatpush.msra.mxu0 0.0
        %2614 = vmatpush.msra.mxu0 0.0
        %v2615 = vand.u32 %v277, 4294901760
        %v2616 = vsub.f32 %v277, %v2615
        %v2617 = vand.u32 %v2616, 4294901760
        %2618 = vmatpush.msra.mxu0 %v2617
        %v2619 = vand.u32 %v276, 4294901760
        %v2620 = vsub.f32 %v276, %v2619
        %v2621 = vand.u32 %v2620, 4294901760
        %2622 = vmatpush.msra.mxu0 %v2621
        %v2623 = vand.u32 %v275, 4294901760
        %v2624 = vsub.f32 %v275, %v2623
        %v2625 = vand.u32 %v2624, 4294901760
        %2626 = vmatpush.msra.mxu0 %v2625
        %v2627 = vand.u32 %v274, 4294901760
        %v2628 = vsub.f32 %v274, %v2627
        %v2629 = vand.u32 %v2628, 4294901760
        %2630 = vmatpush.msra.mxu0 %v2629
        %v2631 = vand.u32 %v273, 4294901760
        %v2632 = vsub.f32 %v273, %v2631
        %v2633 = vand.u32 %v2632, 4294901760
        %2634 = vmatpush.msra.mxu0 %v2633
        %v2635 = vand.u32 %v272, 4294901760
        %v2636 = vsub.f32 %v272, %v2635
        %v2637 = vand.u32 %v2636, 4294901760
        %2638 = vmatpush.msra.mxu0 %v2637
        %v2639 = vand.u32 %v271, 4294901760
        %v2640 = vsub.f32 %v271, %v2639
        %v2641 = vand.u32 %v2640, 4294901760
        %2642 = vmatpush.msra.mxu0 %v2641
        %v2643 = vand.u32 %v270, 4294901760
        %v2644 = vsub.f32 %v270, %v2643
        %v2645 = vand.u32 %v2644, 4294901760
        %2646 = vmatpush.msra.mxu0 %v2645
        %v2647 = vand.u32 %v2442, 4294901760
        %2648 = vmatmul.f32.gmra.mxu0 %v2647
        %v2649 = vpop.f32.mrf.mxu0
        %v2650 = vadd.f32 %v2605, %v2649
        %2651 = vdwg.mxu0
        %2652 = vmatpush.msra.mxu0 0.0
        %2653 = vmatpush.msra.mxu0 0.0
        %2654 = vmatpush.msra.mxu0 0.0
        %2655 = vmatpush.msra.mxu0 0.0
        %2656 = vmatpush.msra.mxu0 0.0
        %2657 = vmatpush.msra.mxu0 0.0
        %2658 = vmatpush.msra.mxu0 0.0
        %2659 = vmatpush.msra.mxu0 0.0
        %v2660 = vand.u32 %v277, 4294901760
        %2661 = vmatpush.msra.mxu0 %v2660
        %v2662 = vand.u32 %v276, 4294901760
        %2663 = vmatpush.msra.mxu0 %v2662
        %v2664 = vand.u32 %v275, 4294901760
        %2665 = vmatpush.msra.mxu0 %v2664
        %v2666 = vand.u32 %v274, 4294901760
        %2667 = vmatpush.msra.mxu0 %v2666
        %v2668 = vand.u32 %v273, 4294901760
        %2669 = vmatpush.msra.mxu0 %v2668
        %v2670 = vand.u32 %v272, 4294901760
        %2671 = vmatpush.msra.mxu0 %v2670
        %v2672 = vand.u32 %v271, 4294901760
        %2673 = vmatpush.msra.mxu0 %v2672
        %v2674 = vand.u32 %v270, 4294901760
        %2675 = vmatpush.msra.mxu0 %v2674
        %v2676 = vand.u32 %v2442, 4294901760
        %2677 = vmatmul.f32.gmra.mxu0 %v2676
        %v2678 = vpop.f32.mrf.mxu0
        %v2679 = vadd.f32 %v2650, %v2678
        %2680 = vdwg.mxu0
        %v2681 = vperm.slane %v521, 7
        %v2682 = vmul.f32 %v2679, %v2681
        %v2684 = vrot.slane %v2682, 1
        %v2685 = vrot.slane %v2682, 2
        %v2686 = vrot.slane %v2682, 3
        %2690 = vst.msk [vmem:[%s247 + $0x7] sm:$0x1] %vm792, %v2682
        %2691 = vst.msk [vmem:[%s247 + $0xf] sm:$0x1] %vm792, %v2684
        %2692 = vst.msk [vmem:[%s247 + $0x17] sm:$0x1] %vm792, %v2685
        %2693 = vst.msk [vmem:[%s247 + $0x1f] sm:$0x1] %vm792, %v2686
        %s2694 = sand.u32 %s130, 1
        %s2695 = scalar_lea.sflag [#allocation4], %s2694
        %s2696 = sand.u32 %s130, 1
        %s2697 = smul.addr %s2696, 32
        %s2698 = scalar_lea.vmem [#allocation5], %s2697
        // Predicated region
        $region37: #{tpu_custom_call.1} parent=31 // pred_check
          %p2699 = pneg %p140
        $region38: #{tpu_custom_call.1} parent=31 // pred_check_branch
          %2701 = sbr.rel (%p2699) target = $region40
        $region39: #{tpu_custom_call.1} parent=31 // pred_region
          %s2702 = smul.u32 4, %s27
          %2704 = vsyncadd %s2695, 0
          %s2705 = sadd.s32 %s26, %s2702
          %s2706 = smul.addr %s25, 4
          %s2707 = sadd.s32 %s2705, %s2706
          %s2708 = smul.addr %s2707, 8
          %s2709 = scalar_lea.hbm %s3, %s2708
          %s2710 = sshll.u32 %s2698, 4
          %s2711 = int_to_ptr.vmem [resolvable:$true] %s2710
          %s2712 = sshll.u32 %s2709, 4
          %s2713 = int_to_ptr.hbm [resolvable:$true] %s2712
          %2718 = dma.vmem_to_hbm [thread:$0]  %s2711, 512, %s2713, %s2695, 128, 128, 8
        $region40: #{tpu_custom_call.1} parent=31 // pred_fallthru
          _
      $region32: #{tpu_custom_call.1} parent=5 // pred_fallthru
        _
      %p2719 = scmp.le.s32.totalorder 2, %s15
      // Predicated region
      $region41: #{tpu_custom_call.1} parent=5 // pred_check
        %p2720 = pneg %p2719
      $region42: #{tpu_custom_call.1} parent=5 // pred_check_branch
        %2722 = sbr.rel (%p2720) target = $region44
      $region43: #{tpu_custom_call.1} parent=5 // pred_region
        %s2723 = ssub.s32 %s15, 2
        // Predicated region
        $region45: #{tpu_custom_call.1} parent=43 // pred_check
          %p2724 = pneg %p146
        $region46: #{tpu_custom_call.1} parent=43 // pred_check_branch
          %2726 = sbr.rel (%p2724) target = $region48
        $region47: #{tpu_custom_call.1} parent=43 // pred_region
          %s2727 = sand.u32 %s131, 1
          %s2728 = scalar_lea.sflag [#allocation4], %s2727
          %s2729 = sand.u32 %s131, 1
          %s2730 = smul.addr %s2729, 32
          %s2731 = scalar_lea.vmem [#allocation5], %s2730
          %2733 = dma.done %s2728, 512
        $region48: #{tpu_custom_call.1} parent=43 // pred_fallthru
          _
      $region44: #{tpu_custom_call.1} parent=5 // pred_fallthru
        _
    $region6: #{tpu_custom_call.1} parent=1 // loop_footer
      %s19 = sadd.s32 1, %s15
    $region7: #{tpu_custom_call.1} parent=1 // loop_footer_branch
      %14 = sbr.rel target = $region3
    $region8: #{tpu_custom_call.1} parent=1 // loop_exit
      _
    %2734 = vsyncpa [#allocation3], 1
    %s2735 = scalar_lea.sflag [#allocation3], 1
    %2736 = vsyncpa %s2735, 1
    %2737 = vsyncpa [#allocation4], 1
    %s2738 = scalar_lea.sflag [#allocation4], 1
    %2739 = vsyncpa %s2738, 1

</llo_original>
